<compile_context>
chip_gen: v6e
topology: v6e:2x2x1
jax: 0.10.0
libtpu: 0.0.40
codegen_flags: <defaults>
</compile_context>

<pallas_src>
import functools

import jax
import jax.numpy as jnp
from jax.experimental import pallas as pl
from jax.experimental.pallas import tpu as pltpu


# ---------------------------------------------------------------------------
# Tiling constants (large-graph path).  512x1024 int8 adjacency blocks are
# 512 KiB (1 MiB double-buffered): ~85% of HBM roofline while staying far
# under v7x's 64 MiB VMEM.
# ---------------------------------------------------------------------------
_TILE_M = 512    # node-row tile
_TILE_K = 1024   # neighbor (reduction) tile
_LANE = 128      # feature-dim padding target


def _round_up(x, m):
    return (x + m - 1) // m * m


def _choose_tiles(n):
    """Pick (tm, tk, n_pad) so both tiles divide n_pad."""
    n128 = _round_up(n, 128)
    if n128 <= 1024:
        # Small graph: single (row, neighbor) tile, pad only to next 128.
        return n128, n128, n128
    # Large graph: n_pad is a multiple of 1024, so both 512 and 1024 divide it
    # and n_pad // _TILE_M >= 2 keeps both v7x TensorCores busy.
    return _TILE_M, _TILE_K, _round_up(n, max(_TILE_M, _TILE_K))


def _vmem_limit_bytes():
    """Size the scoped-VMEM limit from the actual part (64 MiB v7x, 128 MiB
    v5e/v6e) instead of hard-coding, leaving headroom."""
    try:
        cap = int(pltpu.get_tpu_info().vmem_capacity_bytes)
    except Exception:
        cap = 64 * 1024 * 1024
    limit = min(cap - 16 * 1024 * 1024, 100 * 1024 * 1024)
    return max(limit, 32 * 1024 * 1024)


# ---------------------------------------------------------------------------
# Fused SAGEConv kernel
#   grid = (row tiles i, neighbor tiles k)
#   acc_ref (TM, F_in_pad) f32 accumulates the exact 0/1 neighbor sum,
#   deg_ref (TM, 1)        f32 accumulates the row degree,
#   at k == last: mean scale (f32), [agg | x_root] @ [Wl ; Wr] + b,
#   then relu or masked log_softmax.
# ---------------------------------------------------------------------------
def _sage_conv_kernel(adj_ref, xk_ref, xr_ref, w_ref, b_ref,
                      o_ref, acc_ref, deg_ref, *,
                      n_valid_cols, apply_relu, apply_log_softmax):
    k = pl.program_id(1)

    @pl.when(k == 0)
    def _():
        acc_ref[...] = jnp.zeros_like(acc_ref)
        deg_ref[...] = jnp.zeros_like(deg_ref)

    # int8 0/1 adjacency -> f32 (VPU cast; cheap in this mem-bound regime).
    a_f32 = adj_ref[...].astype(jnp.float32)
    # Exact neighbor sum: bf16 into the MXU, f32 accumulation.
    acc_ref[...] += jnp.dot(a_f32.astype(jnp.bfloat16), xk_ref[...],
                            preferred_element_type=jnp.float32)
    # Row degree accumulated from the already-resident tile (XLU lane reduce).
    deg_ref[...] += jnp.sum(a_f32, axis=1, keepdims=True)

    @pl.when(k == pl.num_programs(1) - 1)
    def _():
        # Exact mean aggregation: 0/1 sum scaled by 1/deg in f32 (matches the
        # reference's adj / where(deg > 0, deg, 1) row-normalization), with a
        # single bf16 rounding before feeding the MXU.
        inv_deg = 1.0 / jnp.maximum(deg_ref[...], 1.0)
        agg = (acc_ref[...] * inv_deg).astype(xk_ref.dtype)
        # Fused epilogue matmul: [agg | x_root] @ [Wl ; Wr]  (K = 2*F_in_pad).
        lhs = jnp.concatenate([agg, xr_ref[...]], axis=-1)
        out = jnp.dot(lhs, w_ref[...], preferred_element_type=jnp.float32)
        out = out + b_ref[...]                               # f32 epilogue
        if apply_relu:
            out = jnp.maximum(out, 0.0)
        if apply_log_softmax:
            # Mask padded class columns so they don't perturb the softmax.
            col = jax.lax.broadcasted_iota(jnp.int32, out.shape, 1)
            out = jnp.where(col < n_valid_cols, out, -jnp.inf)
            m = jnp.max(out, axis=-1, keepdims=True)
            s = out - m
            lse = jnp.log(jnp.sum(jnp.exp(s), axis=-1, keepdims=True))
            out = s - lse
        o_ref[...] = out.astype(o_ref.dtype)


def sage_conv(adj_p, x_p, w_p, b_p, *, tm, tk,
              out_channels_real, apply_relu, apply_log_softmax, out_dtype):
    """One SAGEConv layer on padded inputs (int8 adjacency, bf16 features)."""
    n_pad = adj_p.shape[0]
    f_in_pad = x_p.shape[1]
    f_out_pad = w_p.shape[1]
    grid = (n_pad // tm, n_pad // tk)

    kernel = functools.partial(
        _sage_conv_kernel,
        n_valid_cols=out_channels_real,
        apply_relu=apply_relu,
        apply_log_softmax=apply_log_softmax,
    )
    return pl.pallas_call(
        kernel,
        out_shape=jax.ShapeDtypeStruct((n_pad, f_out_pad), out_dtype),
        grid=grid,
        in_specs=[
            # Adjacency tile (row i, neighbor block k), int8 0/1 stream.
            # (If a profile shows exposed DMA here, add pipeline_mode=
            #  pl.Buffered(3).)
            pl.BlockSpec((tm, tk), lambda i, k: (i, k)),
            # Neighbor features (k block) for aggregation.
            pl.BlockSpec((tk, f_in_pad), lambda i, k: (k, 0)),
            # Root-node features (row block i), used only in the finalize.
            pl.BlockSpec((tm, f_in_pad), lambda i, k: (i, 0)),
            # Stacked [Wl ; Wr] and bias: VMEM-resident across the K axis.
            pl.BlockSpec((2 * f_in_pad, f_out_pad), lambda i, k: (0, 0)),
            pl.BlockSpec((1, f_out_pad), lambda i, k: (0, 0)),
        ],
        out_specs=pl.BlockSpec((tm, f_out_pad), lambda i, k: (i, 0)),
        scratch_shapes=[
            pltpu.VMEM((tm, f_in_pad), jnp.float32),   # neighbor-sum accum
            pltpu.VMEM((tm, 1), jnp.float32),          # degree accum
        ],
        compiler_params=pltpu.CompilerParams(
            dimension_semantics=("parallel", "arbitrary"),
            vmem_limit_bytes=_vmem_limit_bytes(),
        ),
    )(adj_p, x_p, x_p, w_p, b_p)


# ---------------------------------------------------------------------------
# Parameter init (PyG SAGEConv-like: lin_l weight+bias, lin_r weight only),
# stored pre-transposed as (F_in, F_out).
# ---------------------------------------------------------------------------
def init_sage_params(key, in_channels, hidden_channels, out_channels, num_layers):
    dims = [in_channels] + [hidden_channels] * (num_layers - 1) + [out_channels]
    params = []
    for layer in range(num_layers):
        f_in, f_out = dims[layer], dims[layer + 1]
        key, k1, k2, k3 = jax.random.split(key, 4)
        scale = 1.0 / jnp.sqrt(jnp.float32(f_in))
        wl_t = jax.random.uniform(k1, (f_in, f_out), jnp.float32, -scale, scale)
        wr_t = jax.random.uniform(k2, (f_in, f_out), jnp.float32, -scale, scale)
        b = jax.random.uniform(k3, (1, f_out), jnp.float32, -scale, scale)
        params.append((wl_t, wr_t, b))
    return params


def _pad2d(a, rows, cols, dtype):
    out = jnp.zeros((rows, cols), dtype)
    return out.at[:a.shape[0], :a.shape[1]].set(a.astype(dtype))


# ---------------------------------------------------------------------------
# Full forward pass (eval mode: dropout == identity)
# ---------------------------------------------------------------------------
def sage_forward(x, adj, params, *, if_auc=False):
    n, f_in = x.shape
    out_channels = params[-1][0].shape[1]

    tm, tk, n_pad = _choose_tiles(n)

    # Single wrapper pass over the adjacency: exact 0/1 int8, zero-padded.
    # (adjacency is assumed unweighted 0/1, as in the training script; degree
    #  normalization happens inside the kernel in f32.)
    adj_p = jnp.zeros((n_pad, n_pad), jnp.int8)
    adj_p = adj_p.at[:n, :n].set((adj > 0).astype(jnp.int8))

    # Features: pad N to tile multiple, F to 128 lanes; bf16 into the MXU.
    h = _pad2d(x, n_pad, _round_up(f_in, _LANE), jnp.bfloat16)

    num_layers = len(params)
    for li, (wl_t, wr_t, b) in enumerate(params):
        last = li == num_layers - 1
        fi, fo = wl_t.shape
        fi_pad, fo_pad = _round_up(fi, _LANE), _round_up(fo, _LANE)
        # Stack Wl / Wr into one (2*fi_pad, fo_pad) operand -> one K=2*fi_pad
        # matmul in the finalize.
        w_p = jnp.zeros((2 * fi_pad, fo_pad), jnp.bfloat16)
        w_p = w_p.at[:fi, :fo].set(wl_t.astype(jnp.bfloat16))
        w_p = w_p.at[fi_pad:fi_pad + fi, :fo].set(wr_t.astype(jnp.bfloat16))
        b_p = _pad2d(b, 1, fo_pad, jnp.float32)
        h = sage_conv(
            adj_p, h, w_p, b_p, tm=tm, tk=tk,
            out_channels_real=fo,
            apply_relu=not last,                      # F.relu on hidden layers
            apply_log_softmax=(last and not if_auc),  # fused log_softmax
            out_dtype=jnp.float32 if last else jnp.bfloat16,
        )
        # F.dropout(..., training=False) is identity in eval mode.

    return h[:n, :out_channels]


# Pure-JAX f32 reference (coarse correctness check vs. bf16 kernels).
def sage_reference(x, adj, params, *, if_auc=False):
    adj = adj.astype(jnp.float32)
    deg = jnp.sum(adj, axis=1, keepdims=True)
    adj_n = adj / jnp.where(deg > 0, deg, 1.0)
    h = x
    for li, (wl_t, wr_t, b) in enumerate(params):
        h = (adj_n @ h) @ wl_t + h @ wr_t + b
        if li < len(params) - 1:
            h = jax.nn.relu(h)
    if if_auc:
        return h
    return jax.nn.log_softmax(h, axis=-1)


# ---------------------------------------------------------------------------
# Main
# ---------------------------------------------------------------------------
if __name__ == "__main__":
    key = jax.random.PRNGKey(0)

    num_nodes = 200
    in_channels = 8
    hidden_channels = 32
    out_channels = 4
    num_layers = 3

    k_x, k_adj, k_params = jax.random.split(key, 3)

    # Node features (N, F_in)
    x = jax.random.normal(k_x, (num_nodes, in_channels), jnp.float32)
    # Random dense 0/1 adjacency (N, N), ~30% edge density
    adj = (jax.random.uniform(k_adj, (num_nodes, num_nodes)) < 0.3).astype(jnp.float32)

    params = init_sage_params(k_params, in_channels, hidden_channels,
                              out_channels, num_layers)

    # if_auc=False path: fused masked log_softmax epilogue
    out = jax.block_until_ready(sage_forward(x, adj, params, if_auc=False))
    assert out.shape == (num_nodes, out_channels)
    assert bool(jnp.all(jnp.isfinite(out)))
    ref = sage_reference(x, adj, params, if_auc=False)
    assert float(jnp.max(jnp.abs(out - ref))) < 0.5  # bf16-vs-f32 tolerance

    # if_auc=True path: raw logits
    out_auc = jax.block_until_ready(sage_forward(x, adj, params, if_auc=True))
    assert out_auc.shape == (num_nodes, out_channels)
    ref_auc = sage_reference(x, adj, params, if_auc=True)
    assert float(jnp.max(jnp.abs(out_auc - ref_auc))) < 0.5

    print("KERNEL_OK")
</pallas_src>

<mosaic_0001>
module attributes {stable_mosaic.version = 11 : i64} {
  func.func @_sage_conv_kernel(%arg0: i32, %arg1: i32, %arg2: memref<256x256xi8, #tpu.memory_space<vmem>>, %arg3: memref<256x128xbf16, #tpu.memory_space<vmem>>, %arg4: memref<256x128xbf16, #tpu.memory_space<vmem>>, %arg5: memref<256x128xbf16, #tpu.memory_space<vmem>>, %arg6: memref<1x128xf32, #tpu.memory_space<vmem>>, %arg7: memref<256x128xbf16, #tpu.memory_space<vmem>>, %arg8: memref<256x128xf32, #tpu.memory_space<vmem>>, %arg9: memref<256x1xf32, #tpu.memory_space<vmem>>) attributes {dimension_semantics = [#tpu.dimension_semantics<parallel>, #tpu.dimension_semantics<arbitrary>], iteration_bounds = array<i64: 1, 1>, scalar_prefetch = 0 : i64, scratch_operands = 2 : i64, tpu.core_type = #tpu.core_type<tc>, window_params = [{transform_indices = @transform_0, window_bounds = array<i64: 256, 256>}, {transform_indices = @transform_1, window_bounds = array<i64: 256, 128>}, {transform_indices = @transform_2, window_bounds = array<i64: 256, 128>}, {pipeline_mode = #tpu.pipeline_mode<synchronous>, transform_indices = @transform_3, window_bounds = array<i64: 256, 128>}, {pipeline_mode = #tpu.pipeline_mode<synchronous>, transform_indices = @transform_4, window_bounds = array<i64: 1, 128>}, {transform_indices = @transform_5, window_bounds = array<i64: 256, 128>}]} {
    %c0_i32 = arith.constant 0 : i32
    %0 = arith.cmpi eq, %arg1, %c0_i32 : i32
    %1 = arith.extui %0 : i1 to i32
    %c0_i32_0 = arith.constant 0 : i32
    %2 = arith.cmpi ne, %1, %c0_i32_0 : i32
    scf.if %2 {
      %cst_15 = arith.constant 0.000000e+00 : f32
      %19 = vector.broadcast %cst_15 : f32 to vector<256x128xf32>
      %c0_16 = arith.constant 0 : index
      %c0_17 = arith.constant 0 : index
      %20 = vector.load %arg8[%c0_16, %c0_17] : memref<256x128xf32, #tpu.memory_space<vmem>>, vector<256x128xf32>
      tpu.vector_store %arg8[%c0_16, %c0_17], %19 {strides = array<i32>} : memref<256x128xf32, #tpu.memory_space<vmem>>, vector<256x128xf32>,
      %cst_18 = arith.constant 0.000000e+00 : f32
      %21 = vector.broadcast %cst_18 : f32 to vector<256x1xf32>
      %c0_19 = arith.constant 0 : index
      %c0_20 = arith.constant 0 : index
      %22 = vector.load %arg9[%c0_19, %c0_20] : memref<256x1xf32, #tpu.memory_space<vmem>>, vector<256x1xf32>
      tpu.vector_store %arg9[%c0_19, %c0_20], %21 {strides = array<i32>} : memref<256x1xf32, #tpu.memory_space<vmem>>, vector<256x1xf32>,
    } else {
    }
    %c0 = arith.constant 0 : index
    %c0_1 = arith.constant 0 : index
    %3 = vector.load %arg2[%c0, %c0_1] : memref<256x256xi8, #tpu.memory_space<vmem>>, vector<256x256xi8>
    %4 = arith.sitofp %3 : vector<256x256xi8> to vector<256x256xf32>
    %c0_2 = arith.constant 0 : index
    %c0_3 = arith.constant 0 : index
    %5 = vector.load %arg8[%c0_2, %c0_3] : memref<256x128xf32, #tpu.memory_space<vmem>>, vector<256x128xf32>
    %6 = arith.truncf %4 : vector<256x256xf32> to vector<256x256xbf16>
    %c0_4 = arith.constant 0 : index
    %c0_5 = arith.constant 0 : index
    %7 = vector.load %arg3[%c0_4, %c0_5] : memref<256x128xbf16, #tpu.memory_space<vmem>>, vector<256x128xbf16>
    %cst = arith.constant dense<0.000000e+00> : vector<256x128xf32>
    %8 = tpu.matmul %6, %7, %cst {dimension_numbers = #tpu.dot_dimension_numbers<[1], [0], [0], [1], [0, 0, 1, 1], [], []>} : vector<256x256xbf16>, vector<256x128xbf16>, vector<256x128xf32> -> vector<256x128xf32>
    %9 = arith.addf %5, %8 : vector<256x128xf32>
    %c0_6 = arith.constant 0 : index
    %c0_7 = arith.constant 0 : index
    %10 = vector.load %arg8[%c0_6, %c0_7] : memref<256x128xf32, #tpu.memory_space<vmem>>, vector<256x128xf32>
    tpu.vector_store %arg8[%c0_6, %c0_7], %9 {strides = array<i32>} : memref<256x128xf32, #tpu.memory_space<vmem>>, vector<256x128xf32>,
    %c0_8 = arith.constant 0 : index
    %c0_9 = arith.constant 0 : index
    %11 = vector.load %arg9[%c0_8, %c0_9] : memref<256x1xf32, #tpu.memory_space<vmem>>, vector<256x1xf32>
    %cst_10 = arith.constant dense<0.000000e+00> : vector<256xf32>
    %12 = vector.multi_reduction <add>, %4, %cst_10 [1] : vector<256x256xf32> to vector<256xf32>
    %13 = vector.shape_cast %12 : vector<256xf32> to vector<256x1xf32>
    %14 = arith.addf %11, %13 : vector<256x1xf32>
    %c0_11 = arith.constant 0 : index
    %c0_12 = arith.constant 0 : index
    %15 = vector.load %arg9[%c0_11, %c0_12] : memref<256x1xf32, #tpu.memory_space<vmem>>, vector<256x1xf32>
    tpu.vector_store %arg9[%c0_11, %c0_12], %14 {strides = array<i32>} : memref<256x1xf32, #tpu.memory_space<vmem>>, vector<256x1xf32>,
    %c0_i32_13 = arith.constant 0 : i32
    %16 = arith.cmpi eq, %arg1, %c0_i32_13 : i32
    %17 = arith.extui %16 : i1 to i32
    %c0_i32_14 = arith.constant 0 : i32
    %18 = arith.cmpi ne, %17, %c0_i32_14 : i32
    scf.if %18 {
      %c0_15 = arith.constant 0 : index
      %c0_16 = arith.constant 0 : index
      %19 = vector.load %arg9[%c0_15, %c0_16] : memref<256x1xf32, #tpu.memory_space<vmem>>, vector<256x1xf32>
      %cst_17 = arith.constant 1.000000e+00 : f32
      %20 = vector.broadcast %cst_17 : f32 to vector<256x1xf32>
      %21 = arith.maximumf %19, %20 : vector<256x1xf32>
      %cst_18 = arith.constant 1.000000e+00 : f32
      %22 = vector.broadcast %cst_18 : f32 to vector<256x1xf32>
      %23 = arith.divf %22, %21 : vector<256x1xf32>
      %c0_19 = arith.constant 0 : index
      %c0_20 = arith.constant 0 : index
      %24 = vector.load %arg8[%c0_19, %c0_20] : memref<256x128xf32, #tpu.memory_space<vmem>>, vector<256x128xf32>
      %25 = vector.broadcast %23 : vector<256x1xf32> to vector<256x128xf32>
      %26 = arith.mulf %24, %25 : vector<256x128xf32>
      %27 = arith.truncf %26 : vector<256x128xf32> to vector<256x128xbf16>
      %c0_21 = arith.constant 0 : index
      %c0_22 = arith.constant 0 : index
      %28 = vector.load %arg4[%c0_21, %c0_22] : memref<256x128xbf16, #tpu.memory_space<vmem>>, vector<256x128xbf16>
      %29 = tpu.concatenate %27, %28 in 1 : vector<256x128xbf16>, vector<256x128xbf16> -> vector<256x256xbf16>
      %c0_23 = arith.constant 0 : index
      %c0_24 = arith.constant 0 : index
      %30 = vector.load %arg5[%c0_23, %c0_24] : memref<256x128xbf16, #tpu.memory_space<vmem>>, vector<256x128xbf16>
      %cst_25 = arith.constant dense<0.000000e+00> : vector<256x128xf32>
      %31 = tpu.matmul %29, %30, %cst_25 {dimension_numbers = #tpu.dot_dimension_numbers<[1], [0], [0], [1], [0, 0, 1, 1], [], []>} : vector<256x256xbf16>, vector<256x128xbf16>, vector<256x128xf32> -> vector<256x128xf32>
      %c0_26 = arith.constant 0 : index
      %c0_27 = arith.constant 0 : index
      %32 = vector.load %arg6[%c0_26, %c0_27] : memref<1x128xf32, #tpu.memory_space<vmem>>, vector<1x128xf32>
      %33 = vector.broadcast %32 : vector<1x128xf32> to vector<256x128xf32>
      %34 = arith.addf %31, %33 : vector<256x128xf32>
      %cst_28 = arith.constant 0.000000e+00 : f32
      %35 = vector.broadcast %cst_28 : f32 to vector<256x128xf32>
      %36 = arith.maximumf %34, %35 : vector<256x128xf32>
      %37 = arith.truncf %36 : vector<256x128xf32> to vector<256x128xbf16>
      %c0_29 = arith.constant 0 : index
      %c0_30 = arith.constant 0 : index
      %38 = vector.load %arg7[%c0_29, %c0_30] : memref<256x128xbf16, #tpu.memory_space<vmem>>, vector<256x128xbf16>
      tpu.vector_store %arg7[%c0_29, %c0_30], %37 {strides = array<i32>} : memref<256x128xbf16, #tpu.memory_space<vmem>>, vector<256x128xbf16>,
    } else {
    }
    return
  }
  func.func @transform_0(%arg0: i32, %arg1: i32) -> (i32, i32) {
    %c0_i32 = arith.constant 0 : i32
    return %arg0, %arg1 : i32, i32
  }
  func.func @transform_1(%arg0: i32, %arg1: i32) -> (i32, i32) {
    %c0_i32 = arith.constant 0 : i32
    %c0_i32_0 = arith.constant 0 : i32
    return %arg1, %c0_i32 : i32, i32
  }
  func.func @transform_2(%arg0: i32, %arg1: i32) -> (i32, i32) {
    %c0_i32 = arith.constant 0 : i32
    %c0_i32_0 = arith.constant 0 : i32
    return %arg0, %c0_i32 : i32, i32
  }
  func.func @transform_3(%arg0: i32, %arg1: i32) -> (i32, i32) {
    %c0_i32 = arith.constant 0 : i32
    %c0_i32_0 = arith.constant 0 : i32
    %c0_i32_1 = arith.constant 0 : i32
    return %c0_i32, %c0_i32_0 : i32, i32
  }
  func.func @transform_4(%arg0: i32, %arg1: i32) -> (i32, i32) {
    %c0_i32 = arith.constant 0 : i32
    %c0_i32_0 = arith.constant 0 : i32
    %c0_i32_1 = arith.constant 0 : i32
    return %c0_i32, %c0_i32_0 : i32, i32
  }
  func.func @transform_5(%arg0: i32, %arg1: i32) -> (i32, i32) {
    %c0_i32 = arith.constant 0 : i32
    %c0_i32_0 = arith.constant 0 : i32
    return %arg0, %c0_i32 : i32, i32
  }
}

</mosaic_0001>

<llo_original>
// kernel: tpu_custom_call.1
$region0: #{tpu_custom_call.1}
  #allocation0 [shape = 'u32[]', space=smem, size = 0x4, offset = 0x4, fixed_abs, tag = 'smem constant byte address 0x4 - core index']
  #allocation1 [shape = 'u32[144,128]{1,0:T(1,128)}', space=vmem, size = 0x12000, scoped, tag = 'internal scratch']
  #allocation2 [shape = 'f32[256,128]{1,0:T(8,128)}', space=vmem, size = 0x20000, scoped, tag = 'scratch operand']
  #allocation3 [shape = 'f32[256,1]{1,0:T(8,128)}', space=vmem, size = 0x20000, scoped, tag = 'scratch operand']
  %s0 = inlined_call_operand.hbm [shape: s8[256,256], index: 0, kind: input, shape index: {}]
  %s1 = inlined_call_operand.hbm [shape: bf16[256,128], index: 1, kind: input, shape index: {}]
  %s2 = inlined_call_operand.hbm [shape: bf16[256,128], index: 2, kind: input, shape index: {}]
  %s3 = inlined_call_operand.hbm [shape: bf16[256,128], index: 3, kind: input, shape index: {}]
  %s4 = inlined_call_operand.vmem [shape: f32[1,128], index: 4, kind: input, shape index: {}]
  %s5 = inlined_call_operand.hbm [shape: bf16[256,128], index: 5, kind: output, shape index: {}]
  %s6 = sld [smem:[#allocation0]]
  $region54: #{tpu_custom_call.1} parent=0
    _
  %s8 = ssub.s32 1, %s6
  %s9 = scalar_select 0, %s8, %s6
  $region1: #{tpu_custom_call.1} parent=0
    #allocation4 [shape = 'u8[65536]{0}', space=vmem, size = 0x10000, scoped, tag = 'input window, operand 0, single buffered']
    #allocation5 [shape = 's32[1]{0}', space=sflag, size = 0x4, scoped, tag = 'scoped memory for tpu_custom_call.1']
    #allocation6 [shape = 's32[1]{0}', space=sflag, size = 0x4, scoped, tag = 'scoped memory for tpu_custom_call.1']
    #allocation7 [shape = 'u8[65536]{0}', space=vmem, size = 0x10000, scoped, tag = 'input window, operand 1, single buffered']
    #allocation8 [shape = 's32[1]{0}', space=sflag, size = 0x4, scoped, tag = 'scoped memory for tpu_custom_call.1']
    #allocation9 [shape = 'u8[65536]{0}', space=vmem, size = 0x10000, scoped, tag = 'input window, operand 2, single buffered']
    #allocation10 [shape = 'u8[65536]{0}', space=vmem, size = 0x10000, scoped, tag = 'input window, operand 3, single buffered']
    #allocation11 [shape = 's32[1]{0}', space=sflag, size = 0x4, scoped, tag = 'scoped memory for tpu_custom_call.1']
    #allocation12 [shape = 'u8[65536]{0}', space=vmem, size = 0x10000, scoped, tag = 'output window, operand 0, single buffered']
    %10 = vsyncpa [#allocation5], 0
    %11 = vsyncpa [#allocation8], 0
    %12 = vsyncpa [#allocation11], 0
    %13 = vsyncpa [#allocation6], 0
    // Predicated region
    $region2: #{tpu_custom_call.1} parent=1 // pred_check
      _
    $region3: #{tpu_custom_call.1} parent=1 // pred_check_branch
      %15 = sbr.rel (0) target = $region5
    $region4: #{tpu_custom_call.1} parent=1 // pred_region
      %s17 = ssub.s32 2048, 2048
      %18 = vsyncadd [#allocation5], %s17
      %s19 = sshll.u32 [#allocation4], 4
      %s20 = int_to_ptr.vmem [resolvable:$true] %s19
      %25 = dma.hbm_to_vmem [thread:$0]  %s0, 2048, %s20, [#allocation5], 256, 256, 16
    $region5: #{tpu_custom_call.1} parent=1 // pred_fallthru
      _
    // Predicated region
    $region6: #{tpu_custom_call.1} parent=1 // pred_check
      _
    $region7: #{tpu_custom_call.1} parent=1 // pred_check_branch
      %27 = sbr.rel (0) target = $region9
    $region8: #{tpu_custom_call.1} parent=1 // pred_region
      %s29 = ssub.s32 2048, 2048
      %30 = vsyncadd [#allocation8], %s29
      %s31 = sshll.u32 [#allocation7], 4
      %s32 = int_to_ptr.vmem [resolvable:$true] %s31
      %37 = dma.hbm_to_vmem [thread:$0]  %s1, 2048, %s32, [#allocation8], 64, 64, 4
    $region9: #{tpu_custom_call.1} parent=1 // pred_fallthru
      _
    // Predicated region
    $region10: #{tpu_custom_call.1} parent=1 // pred_check
      _
    $region11: #{tpu_custom_call.1} parent=1 // pred_check_branch
      %39 = sbr.rel (0) target = $region13
    $region12: #{tpu_custom_call.1} parent=1 // pred_region
      %s41 = ssub.s32 2048, 2048
      %42 = vsyncadd [#allocation8], %s41
      %s43 = sshll.u32 [#allocation9], 4
      %s44 = int_to_ptr.vmem [resolvable:$true] %s43
      %49 = dma.hbm_to_vmem [thread:$0]  %s2, 2048, %s44, [#allocation8], 64, 64, 4
    $region13: #{tpu_custom_call.1} parent=1 // pred_fallthru
      _
    // Predicated region
    $region14: #{tpu_custom_call.1} parent=1 // pred_check
      _
    $region15: #{tpu_custom_call.1} parent=1 // pred_check_branch
      %51 = sbr.rel (0) target = $region17
    $region16: #{tpu_custom_call.1} parent=1 // pred_region
      %s53 = ssub.s32 2048, 2048
      %54 = vsyncadd [#allocation11], %s53
      %s55 = sshll.u32 [#allocation10], 4
      %s56 = int_to_ptr.vmem [resolvable:$true] %s55
      %61 = dma.hbm_to_vmem [thread:$0]  %s3, 2048, %s56, [#allocation11], 64, 64, 4
    $region17: #{tpu_custom_call.1} parent=1 // pred_fallthru
      _
    // Predicated region
    $region18: #{tpu_custom_call.1} parent=1 // pred_check
      _
    $region19: #{tpu_custom_call.1} parent=1 // pred_check_branch
      %63 = sbr.rel (0) target = $region21
    $region20: #{tpu_custom_call.1} parent=1 // pred_region
      _
    $region21: #{tpu_custom_call.1} parent=1 // pred_fallthru
      _
    // Predicated region
    $region22: #{tpu_custom_call.1} parent=1 // pred_check
      _
    $region23: #{tpu_custom_call.1} parent=1 // pred_check_branch
      %65 = sbr.rel (0) target = $region25
    $region24: #{tpu_custom_call.1} parent=1 // pred_region
      %66 = dma.done [#allocation5], 2048
    $region25: #{tpu_custom_call.1} parent=1 // pred_fallthru
      _
    // Predicated region
    $region26: #{tpu_custom_call.1} parent=1 // pred_check
      _
    $region27: #{tpu_custom_call.1} parent=1 // pred_check_branch
      %68 = sbr.rel (0) target = $region29
    $region28: #{tpu_custom_call.1} parent=1 // pred_region
      %69 = dma.done [#allocation8], 2048
    $region29: #{tpu_custom_call.1} parent=1 // pred_fallthru
      _
    // Predicated region
    $region30: #{tpu_custom_call.1} parent=1 // pred_check
      _
    $region31: #{tpu_custom_call.1} parent=1 // pred_check_branch
      %71 = sbr.rel (0) target = $region33
    $region32: #{tpu_custom_call.1} parent=1 // pred_region
      %72 = dma.done [#allocation8], 2048
    $region33: #{tpu_custom_call.1} parent=1 // pred_fallthru
      _
    // Predicated region
    $region34: #{tpu_custom_call.1} parent=1 // pred_check
      _
    $region35: #{tpu_custom_call.1} parent=1 // pred_check_branch
      %74 = sbr.rel (0) target = $region37
    $region36: #{tpu_custom_call.1} parent=1 // pred_region
      %75 = dma.done [#allocation11], 2048
    $region37: #{tpu_custom_call.1} parent=1 // pred_fallthru
      _
    %p77 = scmp.eq.s32.totalorder 0, 0
    // Predicated region
    $region38: #{tpu_custom_call.1} parent=1 // pred_check
      %p78 = pneg %p77
    $region39: #{tpu_custom_call.1} parent=1 // pred_check_branch
      %80 = sbr.rel (%p78) target = $region41
    $region40: #{tpu_custom_call.1} parent=1 // pred_region
      %81 = vst [vmem:[#allocation2] sm:$0xff] 0.0
      %82 = vst [vmem:[#allocation2 + $0x8] sm:$0xff] 0.0
      %83 = vst [vmem:[#allocation2 + $0x10] sm:$0xff] 0.0
      %84 = vst [vmem:[#allocation2 + $0x18] sm:$0xff] 0.0
      %85 = vst [vmem:[#allocation2 + $0x20] sm:$0xff] 0.0
      %86 = vst [vmem:[#allocation2 + $0x28] sm:$0xff] 0.0
      %87 = vst [vmem:[#allocation2 + $0x30] sm:$0xff] 0.0
      %88 = vst [vmem:[#allocation2 + $0x38] sm:$0xff] 0.0
      %89 = vst [vmem:[#allocation2 + $0x40] sm:$0xff] 0.0
      %90 = vst [vmem:[#allocation2 + $0x48] sm:$0xff] 0.0
      %91 = vst [vmem:[#allocation2 + $0x50] sm:$0xff] 0.0
      %92 = vst [vmem:[#allocation2 + $0x58] sm:$0xff] 0.0
      %93 = vst [vmem:[#allocation2 + $0x60] sm:$0xff] 0.0
      %94 = vst [vmem:[#allocation2 + $0x68] sm:$0xff] 0.0
      %95 = vst [vmem:[#allocation2 + $0x70] sm:$0xff] 0.0
      %96 = vst [vmem:[#allocation2 + $0x78] sm:$0xff] 0.0
      %97 = vst [vmem:[#allocation2 + $0x80] sm:$0xff] 0.0
      %98 = vst [vmem:[#allocation2 + $0x88] sm:$0xff] 0.0
      %99 = vst [vmem:[#allocation2 + $0x90] sm:$0xff] 0.0
      %100 = vst [vmem:[#allocation2 + $0x98] sm:$0xff] 0.0
      %101 = vst [vmem:[#allocation2 + $0xa0] sm:$0xff] 0.0
      %102 = vst [vmem:[#allocation2 + $0xa8] sm:$0xff] 0.0
      %103 = vst [vmem:[#allocation2 + $0xb0] sm:$0xff] 0.0
      %104 = vst [vmem:[#allocation2 + $0xb8] sm:$0xff] 0.0
      %105 = vst [vmem:[#allocation2 + $0xc0] sm:$0xff] 0.0
      %106 = vst [vmem:[#allocation2 + $0xc8] sm:$0xff] 0.0
      %107 = vst [vmem:[#allocation2 + $0xd0] sm:$0xff] 0.0
      %108 = vst [vmem:[#allocation2 + $0xd8] sm:$0xff] 0.0
      %109 = vst [vmem:[#allocation2 + $0xe0] sm:$0xff] 0.0
      %110 = vst [vmem:[#allocation2 + $0xe8] sm:$0xff] 0.0
      %111 = vst [vmem:[#allocation2 + $0xf0] sm:$0xff] 0.0
      %112 = vst [vmem:[#allocation2 + $0xf8] sm:$0xff] 0.0
      %vm113 = vcmask 7168
      %114 = vst.msk [vmem:[#allocation3] sm:$0xff] %vm113, 0.0
      %115 = vst.msk [vmem:[#allocation3 + $0x8] sm:$0xff] %vm113, 0.0
      %116 = vst.msk [vmem:[#allocation3 + $0x10] sm:$0xff] %vm113, 0.0
      %117 = vst.msk [vmem:[#allocation3 + $0x18] sm:$0xff] %vm113, 0.0
      %118 = vst.msk [vmem:[#allocation3 + $0x20] sm:$0xff] %vm113, 0.0
      %119 = vst.msk [vmem:[#allocation3 + $0x28] sm:$0xff] %vm113, 0.0
      %120 = vst.msk [vmem:[#allocation3 + $0x30] sm:$0xff] %vm113, 0.0
      %121 = vst.msk [vmem:[#allocation3 + $0x38] sm:$0xff] %vm113, 0.0
      %122 = vst.msk [vmem:[#allocation3 + $0x40] sm:$0xff] %vm113, 0.0
      %123 = vst.msk [vmem:[#allocation3 + $0x48] sm:$0xff] %vm113, 0.0
      %124 = vst.msk [vmem:[#allocation3 + $0x50] sm:$0xff] %vm113, 0.0
      %125 = vst.msk [vmem:[#allocation3 + $0x58] sm:$0xff] %vm113, 0.0
      %126 = vst.msk [vmem:[#allocation3 + $0x60] sm:$0xff] %vm113, 0.0
      %127 = vst.msk [vmem:[#allocation3 + $0x68] sm:$0xff] %vm113, 0.0
      %128 = vst.msk [vmem:[#allocation3 + $0x70] sm:$0xff] %vm113, 0.0
      %129 = vst.msk [vmem:[#allocation3 + $0x78] sm:$0xff] %vm113, 0.0
      %130 = vst.msk [vmem:[#allocation3 + $0x80] sm:$0xff] %vm113, 0.0
      %131 = vst.msk [vmem:[#allocation3 + $0x88] sm:$0xff] %vm113, 0.0
      %132 = vst.msk [vmem:[#allocation3 + $0x90] sm:$0xff] %vm113, 0.0
      %133 = vst.msk [vmem:[#allocation3 + $0x98] sm:$0xff] %vm113, 0.0
      %134 = vst.msk [vmem:[#allocation3 + $0xa0] sm:$0xff] %vm113, 0.0
      %135 = vst.msk [vmem:[#allocation3 + $0xa8] sm:$0xff] %vm113, 0.0
      %136 = vst.msk [vmem:[#allocation3 + $0xb0] sm:$0xff] %vm113, 0.0
      %137 = vst.msk [vmem:[#allocation3 + $0xb8] sm:$0xff] %vm113, 0.0
      %138 = vst.msk [vmem:[#allocation3 + $0xc0] sm:$0xff] %vm113, 0.0
      %139 = vst.msk [vmem:[#allocation3 + $0xc8] sm:$0xff] %vm113, 0.0
      %140 = vst.msk [vmem:[#allocation3 + $0xd0] sm:$0xff] %vm113, 0.0
      %141 = vst.msk [vmem:[#allocation3 + $0xd8] sm:$0xff] %vm113, 0.0
      %142 = vst.msk [vmem:[#allocation3 + $0xe0] sm:$0xff] %vm113, 0.0
      %143 = vst.msk [vmem:[#allocation3 + $0xe8] sm:$0xff] %vm113, 0.0
      %144 = vst.msk [vmem:[#allocation3 + $0xf0] sm:$0xff] %vm113, 0.0
      %145 = vst.msk [vmem:[#allocation3 + $0xf8] sm:$0xff] %vm113, 0.0
    $region41: #{tpu_custom_call.1} parent=1 // pred_fallthru
      _
    %v146 = vld [vmem:[#allocation4] sm:$0xff]
    %v147 = vld [vmem:[#allocation4 + $0x8] sm:$0xff]
    %v148 = vld [vmem:[#allocation4 + $0x10] sm:$0xff]
    %v149 = vld [vmem:[#allocation4 + $0x18] sm:$0xff]
    %v150 = vld [vmem:[#allocation4 + $0x20] sm:$0xff]
    %v151 = vld [vmem:[#allocation4 + $0x28] sm:$0xff]
    %v152 = vld [vmem:[#allocation4 + $0x30] sm:$0xff]
    %v153 = vld [vmem:[#allocation4 + $0x38] sm:$0xff]
    %v154 = vld [vmem:[#allocation4 + $0x40] sm:$0xff]
    %v155 = vld [vmem:[#allocation4 + $0x48] sm:$0xff]
    %v156 = vld [vmem:[#allocation4 + $0x50] sm:$0xff]
    %v157 = vld [vmem:[#allocation4 + $0x58] sm:$0xff]
    %v158 = vld [vmem:[#allocation4 + $0x60] sm:$0xff]
    %v159 = vld [vmem:[#allocation4 + $0x68] sm:$0xff]
    %v160 = vld [vmem:[#allocation4 + $0x70] sm:$0xff]
    %v161 = vld [vmem:[#allocation4 + $0x78] sm:$0xff]
    %v162 = vunpack.c.0.s8 %v146
    %v163 = vunpack.c.0.s8 %v147
    %v164 = vunpack.c.1.s8 %v146
    %v165 = vunpack.c.1.s8 %v147
    %v166 = vunpack.c.2.s8 %v146
    %v167 = vunpack.c.2.s8 %v147
    %v168 = vunpack.c.3.s8 %v146
    %v169 = vunpack.c.3.s8 %v147
    %v170 = vunpack.c.0.s8 %v148
    %v171 = vunpack.c.0.s8 %v149
    %v172 = vunpack.c.1.s8 %v148
    %v173 = vunpack.c.1.s8 %v149
    %v174 = vunpack.c.2.s8 %v148
    %v175 = vunpack.c.2.s8 %v149
    %v176 = vunpack.c.3.s8 %v148
    %v177 = vunpack.c.3.s8 %v149
    %v178 = vunpack.c.0.s8 %v150
    %v179 = vunpack.c.0.s8 %v151
    %v180 = vunpack.c.1.s8 %v150
    %v181 = vunpack.c.1.s8 %v151
    %v182 = vunpack.c.2.s8 %v150
    %v183 = vunpack.c.2.s8 %v151
    %v184 = vunpack.c.3.s8 %v150
    %v185 = vunpack.c.3.s8 %v151
    %v186 = vunpack.c.0.s8 %v152
    %v187 = vunpack.c.0.s8 %v153
    %v188 = vunpack.c.1.s8 %v152
    %v189 = vunpack.c.1.s8 %v153
    %v190 = vunpack.c.2.s8 %v152
    %v191 = vunpack.c.2.s8 %v153
    %v192 = vunpack.c.3.s8 %v152
    %v193 = vunpack.c.3.s8 %v153
    %v194 = vunpack.c.0.s8 %v154
    %v195 = vunpack.c.0.s8 %v155
    %v196 = vunpack.c.1.s8 %v154
    %v197 = vunpack.c.1.s8 %v155
    %v198 = vunpack.c.2.s8 %v154
    %v199 = vunpack.c.2.s8 %v155
    %v200 = vunpack.c.3.s8 %v154
    %v201 = vunpack.c.3.s8 %v155
    %v202 = vunpack.c.0.s8 %v156
    %v203 = vunpack.c.0.s8 %v157
    %v204 = vunpack.c.1.s8 %v156
    %v205 = vunpack.c.1.s8 %v157
    %v206 = vunpack.c.2.s8 %v156
    %v207 = vunpack.c.2.s8 %v157
    %v208 = vunpack.c.3.s8 %v156
    %v209 = vunpack.c.3.s8 %v157
    %v210 = vunpack.c.0.s8 %v158
    %v211 = vunpack.c.0.s8 %v159
    %v212 = vunpack.c.1.s8 %v158
    %v213 = vunpack.c.1.s8 %v159
    %v214 = vunpack.c.2.s8 %v158
    %v215 = vunpack.c.2.s8 %v159
    %v216 = vunpack.c.3.s8 %v158
    %v217 = vunpack.c.3.s8 %v159
    %v218 = vunpack.c.0.s8 %v160
    %v219 = vunpack.c.0.s8 %v161
    %v220 = vunpack.c.1.s8 %v160
    %v221 = vunpack.c.1.s8 %v161
    %v222 = vunpack.c.2.s8 %v160
    %v223 = vunpack.c.2.s8 %v161
    %v224 = vunpack.c.3.s8 %v160
    %v225 = vunpack.c.3.s8 %v161
    %v226 = vcvt.s32.f32 %v162
    %v227 = vcvt.s32.f32 %v163
    %v228 = vcvt.s32.f32 %v164
    %v229 = vcvt.s32.f32 %v165
    %v230 = vcvt.s32.f32 %v166
    %v231 = vcvt.s32.f32 %v167
    %v232 = vcvt.s32.f32 %v168
    %v233 = vcvt.s32.f32 %v169
    %v234 = vcvt.s32.f32 %v170
    %v235 = vcvt.s32.f32 %v171
    %v236 = vcvt.s32.f32 %v172
    %v237 = vcvt.s32.f32 %v173
    %v238 = vcvt.s32.f32 %v174
    %v239 = vcvt.s32.f32 %v175
    %v240 = vcvt.s32.f32 %v176
    %v241 = vcvt.s32.f32 %v177
    %v242 = vcvt.s32.f32 %v178
    %v243 = vcvt.s32.f32 %v179
    %v244 = vcvt.s32.f32 %v180
    %v245 = vcvt.s32.f32 %v181
    %v246 = vcvt.s32.f32 %v182
    %v247 = vcvt.s32.f32 %v183
    %v248 = vcvt.s32.f32 %v184
    %v249 = vcvt.s32.f32 %v185
    %v250 = vcvt.s32.f32 %v186
    %v251 = vcvt.s32.f32 %v187
    %v252 = vcvt.s32.f32 %v188
    %v253 = vcvt.s32.f32 %v189
    %v254 = vcvt.s32.f32 %v190
    %v255 = vcvt.s32.f32 %v191
    %v256 = vcvt.s32.f32 %v192
    %v257 = vcvt.s32.f32 %v193
    %v258 = vcvt.s32.f32 %v194
    %v259 = vcvt.s32.f32 %v195
    %v260 = vcvt.s32.f32 %v196
    %v261 = vcvt.s32.f32 %v197
    %v262 = vcvt.s32.f32 %v198
    %v263 = vcvt.s32.f32 %v199
    %v264 = vcvt.s32.f32 %v200
    %v265 = vcvt.s32.f32 %v201
    %v266 = vcvt.s32.f32 %v202
    %v267 = vcvt.s32.f32 %v203
    %v268 = vcvt.s32.f32 %v204
    %v269 = vcvt.s32.f32 %v205
    %v270 = vcvt.s32.f32 %v206
    %v271 = vcvt.s32.f32 %v207
    %v272 = vcvt.s32.f32 %v208
    %v273 = vcvt.s32.f32 %v209
    %v274 = vcvt.s32.f32 %v210
    %v275 = vcvt.s32.f32 %v211
    %v276 = vcvt.s32.f32 %v212
    %v277 = vcvt.s32.f32 %v213
    %v278 = vcvt.s32.f32 %v214
    %v279 = vcvt.s32.f32 %v215
    %v280 = vcvt.s32.f32 %v216
    %v281 = vcvt.s32.f32 %v217
    %v282 = vcvt.s32.f32 %v218
    %v283 = vcvt.s32.f32 %v219
    %v284 = vcvt.s32.f32 %v220
    %v285 = vcvt.s32.f32 %v221
    %v286 = vcvt.s32.f32 %v222
    %v287 = vcvt.s32.f32 %v223
    %v288 = vcvt.s32.f32 %v224
    %v289 = vcvt.s32.f32 %v225
    %v290 = vld [vmem:[#allocation2] sm:$0xff]
    %v291 = vld [vmem:[#allocation2 + $0x8] sm:$0xff]
    %v292 = vld [vmem:[#allocation2 + $0x10] sm:$0xff]
    %v293 = vld [vmem:[#allocation2 + $0x18] sm:$0xff]
    %v294 = vld [vmem:[#allocation2 + $0x20] sm:$0xff]
    %v295 = vld [vmem:[#allocation2 + $0x28] sm:$0xff]
    %v296 = vld [vmem:[#allocation2 + $0x30] sm:$0xff]
    %v297 = vld [vmem:[#allocation2 + $0x38] sm:$0xff]
    %v298 = vld [vmem:[#allocation2 + $0x40] sm:$0xff]
    %v299 = vld [vmem:[#allocation2 + $0x48] sm:$0xff]
    %v300 = vld [vmem:[#allocation2 + $0x50] sm:$0xff]
    %v301 = vld [vmem:[#allocation2 + $0x58] sm:$0xff]
    %v302 = vld [vmem:[#allocation2 + $0x60] sm:$0xff]
    %v303 = vld [vmem:[#allocation2 + $0x68] sm:$0xff]
    %v304 = vld [vmem:[#allocation2 + $0x70] sm:$0xff]
    %v305 = vld [vmem:[#allocation2 + $0x78] sm:$0xff]
    %v306 = vld [vmem:[#allocation2 + $0x80] sm:$0xff]
    %v307 = vld [vmem:[#allocation2 + $0x88] sm:$0xff]
    %v308 = vld [vmem:[#allocation2 + $0x90] sm:$0xff]
    %v309 = vld [vmem:[#allocation2 + $0x98] sm:$0xff]
    %v310 = vld [vmem:[#allocation2 + $0xa0] sm:$0xff]
    %v311 = vld [vmem:[#allocation2 + $0xa8] sm:$0xff]
    %v312 = vld [vmem:[#allocation2 + $0xb0] sm:$0xff]
    %v313 = vld [vmem:[#allocation2 + $0xb8] sm:$0xff]
    %v314 = vld [vmem:[#allocation2 + $0xc0] sm:$0xff]
    %v315 = vld [vmem:[#allocation2 + $0xc8] sm:$0xff]
    %v316 = vld [vmem:[#allocation2 + $0xd0] sm:$0xff]
    %v317 = vld [vmem:[#allocation2 + $0xd8] sm:$0xff]
    %v318 = vld [vmem:[#allocation2 + $0xe0] sm:$0xff]
    %v319 = vld [vmem:[#allocation2 + $0xe8] sm:$0xff]
    %v320 = vld [vmem:[#allocation2 + $0xf0] sm:$0xff]
    %v321 = vld [vmem:[#allocation2 + $0xf8] sm:$0xff]
    %v322 = vunpack.c.l.s8.bf16 %v146
    %v323 = vunpack.c.l.s8.bf16 %v147
    %v324 = vunpack.c.h.s8.bf16 %v146
    %v325 = vunpack.c.h.s8.bf16 %v147
    %v326 = vunpack.c.l.s8.bf16 %v148
    %v327 = vunpack.c.l.s8.bf16 %v149
    %v328 = vunpack.c.h.s8.bf16 %v148
    %v329 = vunpack.c.h.s8.bf16 %v149
    %v330 = vunpack.c.l.s8.bf16 %v150
    %v331 = vunpack.c.l.s8.bf16 %v151
    %v332 = vunpack.c.h.s8.bf16 %v150
    %v333 = vunpack.c.h.s8.bf16 %v151
    %v334 = vunpack.c.l.s8.bf16 %v152
    %v335 = vunpack.c.l.s8.bf16 %v153
    %v336 = vunpack.c.h.s8.bf16 %v152
    %v337 = vunpack.c.h.s8.bf16 %v153
    %v338 = vunpack.c.l.s8.bf16 %v154
    %v339 = vunpack.c.l.s8.bf16 %v155
    %v340 = vunpack.c.h.s8.bf16 %v154
    %v341 = vunpack.c.h.s8.bf16 %v155
    %v342 = vunpack.c.l.s8.bf16 %v156
    %v343 = vunpack.c.l.s8.bf16 %v157
    %v344 = vunpack.c.h.s8.bf16 %v156
    %v345 = vunpack.c.h.s8.bf16 %v157
    %v346 = vunpack.c.l.s8.bf16 %v158
    %v347 = vunpack.c.l.s8.bf16 %v159
    %v348 = vunpack.c.h.s8.bf16 %v158
    %v349 = vunpack.c.h.s8.bf16 %v159
    %v350 = vunpack.c.l.s8.bf16 %v160
    %v351 = vunpack.c.l.s8.bf16 %v161
    %v352 = vunpack.c.h.s8.bf16 %v160
    %v353 = vunpack.c.h.s8.bf16 %v161
    %v354 = vld [vmem:[#allocation7] sm:$0xf]
    %v355 = vld [vmem:[#allocation7 + $0x4] sm:$0xf]
    %v356 = vld [vmem:[#allocation7 + $0x8] sm:$0xf]
    %v357 = vld [vmem:[#allocation7 + $0xc] sm:$0xf]
    %v358 = vld [vmem:[#allocation7 + $0x10] sm:$0xf]
    %v359 = vld [vmem:[#allocation7 + $0x14] sm:$0xf]
    %v360 = vld [vmem:[#allocation7 + $0x18] sm:$0xf]
    %v361 = vld [vmem:[#allocation7 + $0x1c] sm:$0xf]
    %v362 = vld [vmem:[#allocation7 + $0x20] sm:$0xf]
    %v363 = vld [vmem:[#allocation7 + $0x24] sm:$0xf]
    %v364 = vld [vmem:[#allocation7 + $0x28] sm:$0xf]
    %v365 = vld [vmem:[#allocation7 + $0x2c] sm:$0xf]
    %v366 = vld [vmem:[#allocation7 + $0x30] sm:$0xf]
    %v367 = vld [vmem:[#allocation7 + $0x34] sm:$0xf]
    %v368 = vld [vmem:[#allocation7 + $0x38] sm:$0xf]
    %v369 = vld [vmem:[#allocation7 + $0x3c] sm:$0xf]
    %v370 = vld [vmem:[#allocation7 + $0x40] sm:$0xf]
    %v371 = vld [vmem:[#allocation7 + $0x44] sm:$0xf]
    %v372 = vld [vmem:[#allocation7 + $0x48] sm:$0xf]
    %v373 = vld [vmem:[#allocation7 + $0x4c] sm:$0xf]
    %v374 = vld [vmem:[#allocation7 + $0x50] sm:$0xf]
    %v375 = vld [vmem:[#allocation7 + $0x54] sm:$0xf]
    %v376 = vld [vmem:[#allocation7 + $0x58] sm:$0xf]
    %v377 = vld [vmem:[#allocation7 + $0x5c] sm:$0xf]
    %v378 = vld [vmem:[#allocation7 + $0x60] sm:$0xf]
    %v379 = vld [vmem:[#allocation7 + $0x64] sm:$0xf]
    %v380 = vld [vmem:[#allocation7 + $0x68] sm:$0xf]
    %v381 = vld [vmem:[#allocation7 + $0x6c] sm:$0xf]
    %v382 = vld [vmem:[#allocation7 + $0x70] sm:$0xf]
    %v383 = vld [vmem:[#allocation7 + $0x74] sm:$0xf]
    %v384 = vld [vmem:[#allocation7 + $0x78] sm:$0xf]
    %v385 = vld [vmem:[#allocation7 + $0x7c] sm:$0xf]
    %v418 = vunpack.c.l.b16 %v354
    %v419 = vunpack.c.l.b16 %v355
    %v420 = vunpack.c.l.b16 %v356
    %v421 = vunpack.c.l.b16 %v357
    %v422 = vunpack.c.l.b16 %v358
    %v423 = vunpack.c.l.b16 %v359
    %v424 = vunpack.c.l.b16 %v360
    %v425 = vunpack.c.l.b16 %v361
    %v426 = vunpack.c.l.b16 %v362
    %v427 = vunpack.c.l.b16 %v363
    %v428 = vunpack.c.l.b16 %v364
    %v429 = vunpack.c.l.b16 %v365
    %v430 = vunpack.c.l.b16 %v366
    %v431 = vunpack.c.l.b16 %v367
    %v432 = vunpack.c.l.b16 %v368
    %v433 = vunpack.c.l.b16 %v369
    %v434 = vunpack.c.l.b16 %v370
    %v435 = vunpack.c.l.b16 %v371
    %v436 = vunpack.c.l.b16 %v372
    %v437 = vunpack.c.l.b16 %v373
    %v438 = vunpack.c.l.b16 %v374
    %v439 = vunpack.c.l.b16 %v375
    %v440 = vunpack.c.l.b16 %v376
    %v441 = vunpack.c.l.b16 %v377
    %v442 = vunpack.c.l.b16 %v378
    %v443 = vunpack.c.l.b16 %v379
    %v444 = vunpack.c.l.b16 %v380
    %v445 = vunpack.c.l.b16 %v381
    %v446 = vunpack.c.l.b16 %v382
    %v447 = vunpack.c.l.b16 %v383
    %v448 = vunpack.c.l.b16 %v384
    %v449 = vunpack.c.l.b16 %v385
    %v450 = vpack.c.b16 %v419, %v418
    %v451 = vpack.c.b16 %v421, %v420
    %v452 = vpack.c.b16 %v423, %v422
    %v453 = vpack.c.b16 %v425, %v424
    %v454 = vpack.c.b16 %v427, %v426
    %v455 = vpack.c.b16 %v429, %v428
    %v456 = vpack.c.b16 %v431, %v430
    %v457 = vpack.c.b16 %v433, %v432
    %v458 = vpack.c.b16 %v435, %v434
    %v459 = vpack.c.b16 %v437, %v436
    %v460 = vpack.c.b16 %v439, %v438
    %v461 = vpack.c.b16 %v441, %v440
    %v462 = vpack.c.b16 %v443, %v442
    %v463 = vpack.c.b16 %v445, %v444
    %v464 = vpack.c.b16 %v447, %v446
    %v465 = vpack.c.b16 %v449, %v448
    %482 = vmatprep.subr.bf16.mxu0 0
    %483 = vmatpush1.bf16.msra.mxu0 %v457
    %484 = vmatprep.subr.bf16.mxu0 0
    %485 = vmatpush1.bf16.msra.mxu0 %v456
    %486 = vmatprep.subr.bf16.mxu0 0
    %487 = vmatpush1.bf16.msra.mxu0 %v455
    %488 = vmatprep.subr.bf16.mxu0 0
    %489 = vmatpush1.bf16.msra.mxu0 %v454
    %490 = vmatprep.subr.bf16.mxu0 0
    %491 = vmatpush1.bf16.msra.mxu0 %v453
    %492 = vmatprep.subr.bf16.mxu0 0
    %493 = vmatpush1.bf16.msra.mxu0 %v452
    %494 = vmatprep.subr.bf16.mxu0 0
    %495 = vmatpush1.bf16.msra.mxu0 %v451
    %496 = vmatprep.subr.bf16.mxu0 0
    %497 = vmatpush1.bf16.msra.mxu0 %v450
    %498 = vmatprep.subr.bf16.mxu0 0
    %499 = vmatpush2.bf16.msra.mxu0 %v465
    %500 = vmatprep.subr.bf16.mxu0 0
    %501 = vmatpush2.bf16.msra.mxu0 %v464
    %502 = vmatprep.subr.bf16.mxu0 0
    %503 = vmatpush2.bf16.msra.mxu0 %v463
    %504 = vmatprep.subr.bf16.mxu0 0
    %505 = vmatpush2.bf16.msra.mxu0 %v462
    %506 = vmatprep.subr.bf16.mxu0 0
    %507 = vmatpush2.bf16.msra.mxu0 %v461
    %508 = vmatprep.subr.bf16.mxu0 0
    %509 = vmatpush2.bf16.msra.mxu0 %v460
    %510 = vmatprep.subr.bf16.mxu0 0
    %511 = vmatpush2.bf16.msra.mxu0 %v459
    %512 = vmatprep.subr.bf16.mxu0 0
    %513 = vmatpush2.bf16.msra.mxu0 %v458
    %514 = vmatprep.mubr.bf16.mxu0 %v323
    %515 = vmatmul.mubr.bf16.gmra.mxu0 %v322
    %v516 = vpop.f32.mrf.mxu0
    %v517 = vadd.f32 0.0, %v516
    %v518 = vpop.f32.mrf.mxu0
    %v519 = vpop.f32.mrf.mxu0
    %v520 = vadd.f32 0.0, %v519
    %v521 = vpop.f32.mrf.mxu0
    %522 = vmatprep.mubr.bf16.mxu0 %v325
    %523 = vmatmul.mubr.bf16.gmra.mxu0 %v324
    %v524 = vpop.f32.mrf.mxu0
    %v525 = vadd.f32 0.0, %v524
    %v526 = vpop.f32.mrf.mxu0
    %v527 = vpop.f32.mrf.mxu0
    %v528 = vadd.f32 0.0, %v527
    %v529 = vpop.f32.mrf.mxu0
    %530 = vmatprep.mubr.bf16.mxu0 %v327
    %531 = vmatmul.mubr.bf16.gmra.mxu0 %v326
    %v532 = vpop.f32.mrf.mxu0
    %v533 = vadd.f32 0.0, %v532
    %v534 = vpop.f32.mrf.mxu0
    %v535 = vpop.f32.mrf.mxu0
    %v536 = vadd.f32 0.0, %v535
    %v537 = vpop.f32.mrf.mxu0
    %538 = vmatprep.mubr.bf16.mxu0 %v329
    %539 = vmatmul.mubr.bf16.gmra.mxu0 %v328
    %v540 = vpop.f32.mrf.mxu0
    %v541 = vadd.f32 0.0, %v540
    %v542 = vpop.f32.mrf.mxu0
    %v543 = vpop.f32.mrf.mxu0
    %v544 = vadd.f32 0.0, %v543
    %v545 = vpop.f32.mrf.mxu0
    %546 = vmatprep.mubr.bf16.mxu0 %v331
    %547 = vmatmul.mubr.bf16.gmra.mxu0 %v330
    %v548 = vpop.f32.mrf.mxu0
    %v549 = vadd.f32 0.0, %v548
    %v550 = vpop.f32.mrf.mxu0
    %v551 = vpop.f32.mrf.mxu0
    %v552 = vadd.f32 0.0, %v551
    %v553 = vpop.f32.mrf.mxu0
    %554 = vmatprep.mubr.bf16.mxu0 %v333
    %555 = vmatmul.mubr.bf16.gmra.mxu0 %v332
    %v556 = vpop.f32.mrf.mxu0
    %v557 = vadd.f32 0.0, %v556
    %v558 = vpop.f32.mrf.mxu0
    %v559 = vpop.f32.mrf.mxu0
    %v560 = vadd.f32 0.0, %v559
    %v561 = vpop.f32.mrf.mxu0
    %562 = vmatprep.mubr.bf16.mxu0 %v335
    %563 = vmatmul.mubr.bf16.gmra.mxu0 %v334
    %v564 = vpop.f32.mrf.mxu0
    %v565 = vadd.f32 0.0, %v564
    %v566 = vpop.f32.mrf.mxu0
    %v567 = vpop.f32.mrf.mxu0
    %v568 = vadd.f32 0.0, %v567
    %v569 = vpop.f32.mrf.mxu0
    %570 = vmatprep.mubr.bf16.mxu0 %v337
    %571 = vmatmul.mubr.bf16.gmra.mxu0 %v336
    %v572 = vpop.f32.mrf.mxu0
    %v573 = vadd.f32 0.0, %v572
    %v574 = vpop.f32.mrf.mxu0
    %v575 = vpop.f32.mrf.mxu0
    %v576 = vadd.f32 0.0, %v575
    %v577 = vpop.f32.mrf.mxu0
    %578 = vmatprep.mubr.bf16.mxu0 %v339
    %579 = vmatmul.mubr.bf16.gmra.mxu0 %v338
    %v580 = vpop.f32.mrf.mxu0
    %v581 = vadd.f32 0.0, %v580
    %v582 = vpop.f32.mrf.mxu0
    %v583 = vpop.f32.mrf.mxu0
    %v584 = vadd.f32 0.0, %v583
    %v585 = vpop.f32.mrf.mxu0
    %586 = vmatprep.mubr.bf16.mxu0 %v341
    %587 = vmatmul.mubr.bf16.gmra.mxu0 %v340
    %v588 = vpop.f32.mrf.mxu0
    %v589 = vadd.f32 0.0, %v588
    %v590 = vpop.f32.mrf.mxu0
    %v591 = vpop.f32.mrf.mxu0
    %v592 = vadd.f32 0.0, %v591
    %v593 = vpop.f32.mrf.mxu0
    %594 = vmatprep.mubr.bf16.mxu0 %v343
    %595 = vmatmul.mubr.bf16.gmra.mxu0 %v342
    %v596 = vpop.f32.mrf.mxu0
    %v597 = vadd.f32 0.0, %v596
    %v598 = vpop.f32.mrf.mxu0
    %v599 = vpop.f32.mrf.mxu0
    %v600 = vadd.f32 0.0, %v599
    %v601 = vpop.f32.mrf.mxu0
    %602 = vmatprep.mubr.bf16.mxu0 %v345
    %603 = vmatmul.mubr.bf16.gmra.mxu0 %v344
    %v604 = vpop.f32.mrf.mxu0
    %v605 = vadd.f32 0.0, %v604
    %v606 = vpop.f32.mrf.mxu0
    %v607 = vpop.f32.mrf.mxu0
    %v608 = vadd.f32 0.0, %v607
    %v609 = vpop.f32.mrf.mxu0
    %610 = vmatprep.mubr.bf16.mxu0 %v347
    %611 = vmatmul.mubr.bf16.gmra.mxu0 %v346
    %v612 = vpop.f32.mrf.mxu0
    %v613 = vadd.f32 0.0, %v612
    %v614 = vpop.f32.mrf.mxu0
    %v615 = vpop.f32.mrf.mxu0
    %v616 = vadd.f32 0.0, %v615
    %v617 = vpop.f32.mrf.mxu0
    %618 = vmatprep.mubr.bf16.mxu0 %v349
    %619 = vmatmul.mubr.bf16.gmra.mxu0 %v348
    %v620 = vpop.f32.mrf.mxu0
    %v621 = vadd.f32 0.0, %v620
    %v622 = vpop.f32.mrf.mxu0
    %v623 = vpop.f32.mrf.mxu0
    %v624 = vadd.f32 0.0, %v623
    %v625 = vpop.f32.mrf.mxu0
    %626 = vmatprep.mubr.bf16.mxu0 %v351
    %627 = vmatmul.mubr.bf16.gmra.mxu0 %v350
    %v628 = vpop.f32.mrf.mxu0
    %v629 = vadd.f32 0.0, %v628
    %v630 = vpop.f32.mrf.mxu0
    %v631 = vpop.f32.mrf.mxu0
    %v632 = vadd.f32 0.0, %v631
    %v633 = vpop.f32.mrf.mxu0
    %634 = vmatprep.mubr.bf16.mxu0 %v353
    %635 = vmatmul.mubr.bf16.gmra.mxu0 %v352
    %v636 = vpop.f32.mrf.mxu0
    %v637 = vadd.f32 0.0, %v636
    %v638 = vpop.f32.mrf.mxu0
    %v639 = vpop.f32.mrf.mxu0
    %v640 = vadd.f32 0.0, %v639
    %v641 = vpop.f32.mrf.mxu0
    %642 = vdwg.mxu0
    %v643 = vadd.f32 %v290, %v517
    %v644 = vadd.f32 %v291, %v520
    %v645 = vadd.f32 %v292, %v525
    %v646 = vadd.f32 %v293, %v528
    %v647 = vadd.f32 %v294, %v533
    %v648 = vadd.f32 %v295, %v536
    %v649 = vadd.f32 %v296, %v541
    %v650 = vadd.f32 %v297, %v544
    %v651 = vadd.f32 %v298, %v549
    %v652 = vadd.f32 %v299, %v552
    %v653 = vadd.f32 %v300, %v557
    %v654 = vadd.f32 %v301, %v560
    %v655 = vadd.f32 %v302, %v565
    %v656 = vadd.f32 %v303, %v568
    %v657 = vadd.f32 %v304, %v573
    %v658 = vadd.f32 %v305, %v576
    %v659 = vadd.f32 %v306, %v581
    %v660 = vadd.f32 %v307, %v584
    %v661 = vadd.f32 %v308, %v589
    %v662 = vadd.f32 %v309, %v592
    %v663 = vadd.f32 %v310, %v597
    %v664 = vadd.f32 %v311, %v600
    %v665 = vadd.f32 %v312, %v605
    %v666 = vadd.f32 %v313, %v608
    %v667 = vadd.f32 %v314, %v613
    %v668 = vadd.f32 %v315, %v616
    %v669 = vadd.f32 %v316, %v621
    %v670 = vadd.f32 %v317, %v624
    %v671 = vadd.f32 %v318, %v629
    %v672 = vadd.f32 %v319, %v632
    %v673 = vadd.f32 %v320, %v637
    %v674 = vadd.f32 %v321, %v640
    %675 = vst [vmem:[#allocation2] sm:$0xff] %v643
    %676 = vst [vmem:[#allocation2 + $0x8] sm:$0xff] %v644
    %677 = vst [vmem:[#allocation2 + $0x10] sm:$0xff] %v645
    %678 = vst [vmem:[#allocation2 + $0x18] sm:$0xff] %v646
    %679 = vst [vmem:[#allocation2 + $0x20] sm:$0xff] %v647
    %680 = vst [vmem:[#allocation2 + $0x28] sm:$0xff] %v648
    %681 = vst [vmem:[#allocation2 + $0x30] sm:$0xff] %v649
    %682 = vst [vmem:[#allocation2 + $0x38] sm:$0xff] %v650
    %683 = vst [vmem:[#allocation2 + $0x40] sm:$0xff] %v651
    %684 = vst [vmem:[#allocation2 + $0x48] sm:$0xff] %v652
    %685 = vst [vmem:[#allocation2 + $0x50] sm:$0xff] %v653
    %686 = vst [vmem:[#allocation2 + $0x58] sm:$0xff] %v654
    %687 = vst [vmem:[#allocation2 + $0x60] sm:$0xff] %v655
    %688 = vst [vmem:[#allocation2 + $0x68] sm:$0xff] %v656
    %689 = vst [vmem:[#allocation2 + $0x70] sm:$0xff] %v657
    %690 = vst [vmem:[#allocation2 + $0x78] sm:$0xff] %v658
    %691 = vst [vmem:[#allocation2 + $0x80] sm:$0xff] %v659
    %692 = vst [vmem:[#allocation2 + $0x88] sm:$0xff] %v660
    %693 = vst [vmem:[#allocation2 + $0x90] sm:$0xff] %v661
    %694 = vst [vmem:[#allocation2 + $0x98] sm:$0xff] %v662
    %695 = vst [vmem:[#allocation2 + $0xa0] sm:$0xff] %v663
    %696 = vst [vmem:[#allocation2 + $0xa8] sm:$0xff] %v664
    %697 = vst [vmem:[#allocation2 + $0xb0] sm:$0xff] %v665
    %698 = vst [vmem:[#allocation2 + $0xb8] sm:$0xff] %v666
    %699 = vst [vmem:[#allocation2 + $0xc0] sm:$0xff] %v667
    %700 = vst [vmem:[#allocation2 + $0xc8] sm:$0xff] %v668
    %701 = vst [vmem:[#allocation2 + $0xd0] sm:$0xff] %v669
    %702 = vst [vmem:[#allocation2 + $0xd8] sm:$0xff] %v670
    %703 = vst [vmem:[#allocation2 + $0xe0] sm:$0xff] %v671
    %704 = vst [vmem:[#allocation2 + $0xe8] sm:$0xff] %v672
    %705 = vst [vmem:[#allocation2 + $0xf0] sm:$0xff] %v673
    %706 = vst [vmem:[#allocation2 + $0xf8] sm:$0xff] %v674
    %v707 = vld [vmem:[#allocation3] sm:$0xff]
    %v708 = vld [vmem:[#allocation3 + $0x8] sm:$0xff]
    %v709 = vld [vmem:[#allocation3 + $0x10] sm:$0xff]
    %v710 = vld [vmem:[#allocation3 + $0x18] sm:$0xff]
    %v711 = vld [vmem:[#allocation3 + $0x20] sm:$0xff]
    %v712 = vld [vmem:[#allocation3 + $0x28] sm:$0xff]
    %v713 = vld [vmem:[#allocation3 + $0x30] sm:$0xff]
    %v714 = vld [vmem:[#allocation3 + $0x38] sm:$0xff]
    %v715 = vld [vmem:[#allocation3 + $0x40] sm:$0xff]
    %v716 = vld [vmem:[#allocation3 + $0x48] sm:$0xff]
    %v717 = vld [vmem:[#allocation3 + $0x50] sm:$0xff]
    %v718 = vld [vmem:[#allocation3 + $0x58] sm:$0xff]
    %v719 = vld [vmem:[#allocation3 + $0x60] sm:$0xff]
    %v720 = vld [vmem:[#allocation3 + $0x68] sm:$0xff]
    %v721 = vld [vmem:[#allocation3 + $0x70] sm:$0xff]
    %v722 = vld [vmem:[#allocation3 + $0x78] sm:$0xff]
    %v723 = vld [vmem:[#allocation3 + $0x80] sm:$0xff]
    %v724 = vld [vmem:[#allocation3 + $0x88] sm:$0xff]
    %v725 = vld [vmem:[#allocation3 + $0x90] sm:$0xff]
    %v726 = vld [vmem:[#allocation3 + $0x98] sm:$0xff]
    %v727 = vld [vmem:[#allocation3 + $0xa0] sm:$0xff]
    %v728 = vld [vmem:[#allocation3 + $0xa8] sm:$0xff]
    %v729 = vld [vmem:[#allocation3 + $0xb0] sm:$0xff]
    %v730 = vld [vmem:[#allocation3 + $0xb8] sm:$0xff]
    %v731 = vld [vmem:[#allocation3 + $0xc0] sm:$0xff]
    %v732 = vld [vmem:[#allocation3 + $0xc8] sm:$0xff]
    %v733 = vld [vmem:[#allocation3 + $0xd0] sm:$0xff]
    %v734 = vld [vmem:[#allocation3 + $0xd8] sm:$0xff]
    %v735 = vld [vmem:[#allocation3 + $0xe0] sm:$0xff]
    %v736 = vld [vmem:[#allocation3 + $0xe8] sm:$0xff]
    %v737 = vld [vmem:[#allocation3 + $0xf0] sm:$0xff]
    %v738 = vld [vmem:[#allocation3 + $0xf8] sm:$0xff]
    %v739 = vadd.f32 %v226, %v227
    %740 = vadd.xlane.f32.xlu0 %v739
    %v741 = vpop.xlane.xlu0 %740
    %v742 = vadd.f32 %v228, %v229
    %743 = vadd.xlane.f32.xlu0 %v742
    %v744 = vpop.xlane.xlu0 %743
    %v745 = vadd.f32 %v230, %v231
    %746 = vadd.xlane.f32.xlu0 %v745
    %v747 = vpop.xlane.xlu0 %746
    %v748 = vadd.f32 %v232, %v233
    %749 = vadd.xlane.f32.xlu0 %v748
    %v750 = vpop.xlane.xlu0 %749
    %v751 = vadd.f32 %v234, %v235
    %752 = vadd.xlane.f32.xlu0 %v751
    %v753 = vpop.xlane.xlu0 %752
    %v754 = vadd.f32 %v236, %v237
    %755 = vadd.xlane.f32.xlu0 %v754
    %v756 = vpop.xlane.xlu0 %755
    %v757 = vadd.f32 %v238, %v239
    %758 = vadd.xlane.f32.xlu0 %v757
    %v759 = vpop.xlane.xlu0 %758
    %v760 = vadd.f32 %v240, %v241
    %761 = vadd.xlane.f32.xlu0 %v760
    %v762 = vpop.xlane.xlu0 %761
    %v763 = vadd.f32 %v242, %v243
    %764 = vadd.xlane.f32.xlu0 %v763
    %v765 = vpop.xlane.xlu0 %764
    %v766 = vadd.f32 %v244, %v245
    %767 = vadd.xlane.f32.xlu0 %v766
    %v768 = vpop.xlane.xlu0 %767
    %v769 = vadd.f32 %v246, %v247
    %770 = vadd.xlane.f32.xlu0 %v769
    %v771 = vpop.xlane.xlu0 %770
    %v772 = vadd.f32 %v248, %v249
    %773 = vadd.xlane.f32.xlu0 %v772
    %v774 = vpop.xlane.xlu0 %773
    %v775 = vadd.f32 %v250, %v251
    %776 = vadd.xlane.f32.xlu0 %v775
    %v777 = vpop.xlane.xlu0 %776
    %v778 = vadd.f32 %v252, %v253
    %779 = vadd.xlane.f32.xlu0 %v778
    %v780 = vpop.xlane.xlu0 %779
    %v781 = vadd.f32 %v254, %v255
    %782 = vadd.xlane.f32.xlu0 %v781
    %v783 = vpop.xlane.xlu0 %782
    %v784 = vadd.f32 %v256, %v257
    %785 = vadd.xlane.f32.xlu0 %v784
    %v786 = vpop.xlane.xlu0 %785
    %v787 = vadd.f32 %v258, %v259
    %788 = vadd.xlane.f32.xlu0 %v787
    %v789 = vpop.xlane.xlu0 %788
    %v790 = vadd.f32 %v260, %v261
    %791 = vadd.xlane.f32.xlu0 %v790
    %v792 = vpop.xlane.xlu0 %791
    %v793 = vadd.f32 %v262, %v263
    %794 = vadd.xlane.f32.xlu0 %v793
    %v795 = vpop.xlane.xlu0 %794
    %v796 = vadd.f32 %v264, %v265
    %797 = vadd.xlane.f32.xlu0 %v796
    %v798 = vpop.xlane.xlu0 %797
    %v799 = vadd.f32 %v266, %v267
    %800 = vadd.xlane.f32.xlu0 %v799
    %v801 = vpop.xlane.xlu0 %800
    %v802 = vadd.f32 %v268, %v269
    %803 = vadd.xlane.f32.xlu0 %v802
    %v804 = vpop.xlane.xlu0 %803
    %v805 = vadd.f32 %v270, %v271
    %806 = vadd.xlane.f32.xlu0 %v805
    %v807 = vpop.xlane.xlu0 %806
    %v808 = vadd.f32 %v272, %v273
    %809 = vadd.xlane.f32.xlu0 %v808
    %v810 = vpop.xlane.xlu0 %809
    %v811 = vadd.f32 %v274, %v275
    %812 = vadd.xlane.f32.xlu0 %v811
    %v813 = vpop.xlane.xlu0 %812
    %v814 = vadd.f32 %v276, %v277
    %815 = vadd.xlane.f32.xlu0 %v814
    %v816 = vpop.xlane.xlu0 %815
    %v817 = vadd.f32 %v278, %v279
    %818 = vadd.xlane.f32.xlu0 %v817
    %v819 = vpop.xlane.xlu0 %818
    %v820 = vadd.f32 %v280, %v281
    %821 = vadd.xlane.f32.xlu0 %v820
    %v822 = vpop.xlane.xlu0 %821
    %v823 = vadd.f32 %v282, %v283
    %824 = vadd.xlane.f32.xlu0 %v823
    %v825 = vpop.xlane.xlu0 %824
    %v826 = vadd.f32 %v284, %v285
    %827 = vadd.xlane.f32.xlu0 %v826
    %v828 = vpop.xlane.xlu0 %827
    %v829 = vadd.f32 %v286, %v287
    %830 = vadd.xlane.f32.xlu0 %v829
    %v831 = vpop.xlane.xlu0 %830
    %v832 = vadd.f32 %v288, %v289
    %833 = vadd.xlane.f32.xlu0 %v832
    %v834 = vpop.xlane.xlu0 %833
    %v835 = vadd.f32 %v707, %v741
    %v836 = vadd.f32 %v708, %v744
    %v837 = vadd.f32 %v709, %v747
    %v838 = vadd.f32 %v710, %v750
    %v839 = vadd.f32 %v711, %v753
    %v840 = vadd.f32 %v712, %v756
    %v841 = vadd.f32 %v713, %v759
    %v842 = vadd.f32 %v714, %v762
    %v843 = vadd.f32 %v715, %v765
    %v844 = vadd.f32 %v716, %v768
    %v845 = vadd.f32 %v717, %v771
    %v846 = vadd.f32 %v718, %v774
    %v847 = vadd.f32 %v719, %v777
    %v848 = vadd.f32 %v720, %v780
    %v849 = vadd.f32 %v721, %v783
    %v850 = vadd.f32 %v722, %v786
    %v851 = vadd.f32 %v723, %v789
    %v852 = vadd.f32 %v724, %v792
    %v853 = vadd.f32 %v725, %v795
    %v854 = vadd.f32 %v726, %v798
    %v855 = vadd.f32 %v727, %v801
    %v856 = vadd.f32 %v728, %v804
    %v857 = vadd.f32 %v729, %v807
    %v858 = vadd.f32 %v730, %v810
    %v859 = vadd.f32 %v731, %v813
    %v860 = vadd.f32 %v732, %v816
    %v861 = vadd.f32 %v733, %v819
    %v862 = vadd.f32 %v734, %v822
    %v863 = vadd.f32 %v735, %v825
    %v864 = vadd.f32 %v736, %v828
    %v865 = vadd.f32 %v737, %v831
    %v866 = vadd.f32 %v738, %v834
    %vm867 = vcmask 7168
    %868 = vst.msk [vmem:[#allocation3] sm:$0xff] %vm867, %v835
    %869 = vst.msk [vmem:[#allocation3 + $0x8] sm:$0xff] %vm867, %v836
    %870 = vst.msk [vmem:[#allocation3 + $0x10] sm:$0xff] %vm867, %v837
    %871 = vst.msk [vmem:[#allocation3 + $0x18] sm:$0xff] %vm867, %v838
    %872 = vst.msk [vmem:[#allocation3 + $0x20] sm:$0xff] %vm867, %v839
    %873 = vst.msk [vmem:[#allocation3 + $0x28] sm:$0xff] %vm867, %v840
    %874 = vst.msk [vmem:[#allocation3 + $0x30] sm:$0xff] %vm867, %v841
    %875 = vst.msk [vmem:[#allocation3 + $0x38] sm:$0xff] %vm867, %v842
    %876 = vst.msk [vmem:[#allocation3 + $0x40] sm:$0xff] %vm867, %v843
    %877 = vst.msk [vmem:[#allocation3 + $0x48] sm:$0xff] %vm867, %v844
    %878 = vst.msk [vmem:[#allocation3 + $0x50] sm:$0xff] %vm867, %v845
    %879 = vst.msk [vmem:[#allocation3 + $0x58] sm:$0xff] %vm867, %v846
    %880 = vst.msk [vmem:[#allocation3 + $0x60] sm:$0xff] %vm867, %v847
    %881 = vst.msk [vmem:[#allocation3 + $0x68] sm:$0xff] %vm867, %v848
    %882 = vst.msk [vmem:[#allocation3 + $0x70] sm:$0xff] %vm867, %v849
    %883 = vst.msk [vmem:[#allocation3 + $0x78] sm:$0xff] %vm867, %v850
    %884 = vst.msk [vmem:[#allocation3 + $0x80] sm:$0xff] %vm867, %v851
    %885 = vst.msk [vmem:[#allocation3 + $0x88] sm:$0xff] %vm867, %v852
    %886 = vst.msk [vmem:[#allocation3 + $0x90] sm:$0xff] %vm867, %v853
    %887 = vst.msk [vmem:[#allocation3 + $0x98] sm:$0xff] %vm867, %v854
    %888 = vst.msk [vmem:[#allocation3 + $0xa0] sm:$0xff] %vm867, %v855
    %889 = vst.msk [vmem:[#allocation3 + $0xa8] sm:$0xff] %vm867, %v856
    %890 = vst.msk [vmem:[#allocation3 + $0xb0] sm:$0xff] %vm867, %v857
    %891 = vst.msk [vmem:[#allocation3 + $0xb8] sm:$0xff] %vm867, %v858
    %892 = vst.msk [vmem:[#allocation3 + $0xc0] sm:$0xff] %vm867, %v859
    %893 = vst.msk [vmem:[#allocation3 + $0xc8] sm:$0xff] %vm867, %v860
    %894 = vst.msk [vmem:[#allocation3 + $0xd0] sm:$0xff] %vm867, %v861
    %895 = vst.msk [vmem:[#allocation3 + $0xd8] sm:$0xff] %vm867, %v862
    %896 = vst.msk [vmem:[#allocation3 + $0xe0] sm:$0xff] %vm867, %v863
    %897 = vst.msk [vmem:[#allocation3 + $0xe8] sm:$0xff] %vm867, %v864
    %898 = vst.msk [vmem:[#allocation3 + $0xf0] sm:$0xff] %vm867, %v865
    %899 = vst.msk [vmem:[#allocation3 + $0xf8] sm:$0xff] %vm867, %v866
    // Predicated region
    $region42: #{tpu_custom_call.1} parent=1 // pred_check
      %p900 = pneg %p77
    $region43: #{tpu_custom_call.1} parent=1 // pred_check_branch
      %902 = sbr.rel (%p900) target = $region45
    $region44: #{tpu_custom_call.1} parent=1 // pred_region
      %v903 = vld [vmem:[#allocation3] sm:$0xff]
      %v904 = vld [vmem:[#allocation3 + $0x8] sm:$0xff]
      %v905 = vld [vmem:[#allocation3 + $0x10] sm:$0xff]
      %v906 = vld [vmem:[#allocation3 + $0x18] sm:$0xff]
      %v907 = vld [vmem:[#allocation3 + $0x20] sm:$0xff]
      %v908 = vld [vmem:[#allocation3 + $0x28] sm:$0xff]
      %v909 = vld [vmem:[#allocation3 + $0x30] sm:$0xff]
      %v910 = vld [vmem:[#allocation3 + $0x38] sm:$0xff]
      %v911 = vld [vmem:[#allocation3 + $0x40] sm:$0xff]
      %v912 = vld [vmem:[#allocation3 + $0x48] sm:$0xff]
      %v913 = vld [vmem:[#allocation3 + $0x50] sm:$0xff]
      %v914 = vld [vmem:[#allocation3 + $0x58] sm:$0xff]
      %v915 = vld [vmem:[#allocation3 + $0x60] sm:$0xff]
      %v916 = vld [vmem:[#allocation3 + $0x68] sm:$0xff]
      %v917 = vld [vmem:[#allocation3 + $0x70] sm:$0xff]
      %v918 = vld [vmem:[#allocation3 + $0x78] sm:$0xff]
      %v919 = vld [vmem:[#allocation3 + $0x80] sm:$0xff]
      %v920 = vld [vmem:[#allocation3 + $0x88] sm:$0xff]
      %v921 = vld [vmem:[#allocation3 + $0x90] sm:$0xff]
      %v922 = vld [vmem:[#allocation3 + $0x98] sm:$0xff]
      %v923 = vld [vmem:[#allocation3 + $0xa0] sm:$0xff]
      %v924 = vld [vmem:[#allocation3 + $0xa8] sm:$0xff]
      %v925 = vld [vmem:[#allocation3 + $0xb0] sm:$0xff]
      %v926 = vld [vmem:[#allocation3 + $0xb8] sm:$0xff]
      %v927 = vld [vmem:[#allocation3 + $0xc0] sm:$0xff]
      %v928 = vld [vmem:[#allocation3 + $0xc8] sm:$0xff]
      %v929 = vld [vmem:[#allocation3 + $0xd0] sm:$0xff]
      %v930 = vld [vmem:[#allocation3 + $0xd8] sm:$0xff]
      %v931 = vld [vmem:[#allocation3 + $0xe0] sm:$0xff]
      %v932 = vld [vmem:[#allocation3 + $0xe8] sm:$0xff]
      %v933 = vld [vmem:[#allocation3 + $0xf0] sm:$0xff]
      %v934 = vld [vmem:[#allocation3 + $0xf8] sm:$0xff]
      %v935 = vmax.f32 %v903, 1.0
      %v936 = vmax.f32 %v904, 1.0
      %v937 = vmax.f32 %v905, 1.0
      %v938 = vmax.f32 %v906, 1.0
      %v939 = vmax.f32 %v907, 1.0
      %v940 = vmax.f32 %v908, 1.0
      %v941 = vmax.f32 %v909, 1.0
      %v942 = vmax.f32 %v910, 1.0
      %v943 = vmax.f32 %v911, 1.0
      %v944 = vmax.f32 %v912, 1.0
      %v945 = vmax.f32 %v913, 1.0
      %v946 = vmax.f32 %v914, 1.0
      %v947 = vmax.f32 %v915, 1.0
      %v948 = vmax.f32 %v916, 1.0
      %v949 = vmax.f32 %v917, 1.0
      %v950 = vmax.f32 %v918, 1.0
      %v951 = vmax.f32 %v919, 1.0
      %v952 = vmax.f32 %v920, 1.0
      %v953 = vmax.f32 %v921, 1.0
      %v954 = vmax.f32 %v922, 1.0
      %v955 = vmax.f32 %v923, 1.0
      %v956 = vmax.f32 %v924, 1.0
      %v957 = vmax.f32 %v925, 1.0
      %v958 = vmax.f32 %v926, 1.0
      %v959 = vmax.f32 %v927, 1.0
      %v960 = vmax.f32 %v928, 1.0
      %v961 = vmax.f32 %v929, 1.0
      %v962 = vmax.f32 %v930, 1.0
      %v963 = vmax.f32 %v931, 1.0
      %v964 = vmax.f32 %v932, 1.0
      %v965 = vmax.f32 %v933, 1.0
      %v966 = vmax.f32 %v934, 1.0
      %v967 = vrcp.pop %v935
      %v968 = vmul.f32 1.0, %v967
      %v969 = vrcp.pop %v936
      %v970 = vmul.f32 1.0, %v969
      %v971 = vrcp.pop %v937
      %v972 = vmul.f32 1.0, %v971
      %v973 = vrcp.pop %v938
      %v974 = vmul.f32 1.0, %v973
      %v975 = vrcp.pop %v939
      %v976 = vmul.f32 1.0, %v975
      %v977 = vrcp.pop %v940
      %v978 = vmul.f32 1.0, %v977
      %v979 = vrcp.pop %v941
      %v980 = vmul.f32 1.0, %v979
      %v981 = vrcp.pop %v942
      %v982 = vmul.f32 1.0, %v981
      %v983 = vrcp.pop %v943
      %v984 = vmul.f32 1.0, %v983
      %v985 = vrcp.pop %v944
      %v986 = vmul.f32 1.0, %v985
      %v987 = vrcp.pop %v945
      %v988 = vmul.f32 1.0, %v987
      %v989 = vrcp.pop %v946
      %v990 = vmul.f32 1.0, %v989
      %v991 = vrcp.pop %v947
      %v992 = vmul.f32 1.0, %v991
      %v993 = vrcp.pop %v948
      %v994 = vmul.f32 1.0, %v993
      %v995 = vrcp.pop %v949
      %v996 = vmul.f32 1.0, %v995
      %v997 = vrcp.pop %v950
      %v998 = vmul.f32 1.0, %v997
      %v999 = vrcp.pop %v951
      %v1000 = vmul.f32 1.0, %v999
      %v1001 = vrcp.pop %v952
      %v1002 = vmul.f32 1.0, %v1001
      %v1003 = vrcp.pop %v953
      %v1004 = vmul.f32 1.0, %v1003
      %v1005 = vrcp.pop %v954
      %v1006 = vmul.f32 1.0, %v1005
      %v1007 = vrcp.pop %v955
      %v1008 = vmul.f32 1.0, %v1007
      %v1009 = vrcp.pop %v956
      %v1010 = vmul.f32 1.0, %v1009
      %v1011 = vrcp.pop %v957
      %v1012 = vmul.f32 1.0, %v1011
      %v1013 = vrcp.pop %v958
      %v1014 = vmul.f32 1.0, %v1013
      %v1015 = vrcp.pop %v959
      %v1016 = vmul.f32 1.0, %v1015
      %v1017 = vrcp.pop %v960
      %v1018 = vmul.f32 1.0, %v1017
      %v1019 = vrcp.pop %v961
      %v1020 = vmul.f32 1.0, %v1019
      %v1021 = vrcp.pop %v962
      %v1022 = vmul.f32 1.0, %v1021
      %v1023 = vrcp.pop %v963
      %v1024 = vmul.f32 1.0, %v1023
      %v1025 = vrcp.pop %v964
      %v1026 = vmul.f32 1.0, %v1025
      %v1027 = vrcp.pop %v965
      %v1028 = vmul.f32 1.0, %v1027
      %v1029 = vrcp.pop %v966
      %v1030 = vmul.f32 1.0, %v1029
      %v1031 = vld [vmem:[#allocation2] sm:$0xff]
      %v1032 = vld [vmem:[#allocation2 + $0x8] sm:$0xff]
      %v1033 = vld [vmem:[#allocation2 + $0x10] sm:$0xff]
      %v1034 = vld [vmem:[#allocation2 + $0x18] sm:$0xff]
      %v1035 = vld [vmem:[#allocation2 + $0x20] sm:$0xff]
      %v1036 = vld [vmem:[#allocation2 + $0x28] sm:$0xff]
      %v1037 = vld [vmem:[#allocation2 + $0x30] sm:$0xff]
      %v1038 = vld [vmem:[#allocation2 + $0x38] sm:$0xff]
      %v1039 = vld [vmem:[#allocation2 + $0x40] sm:$0xff]
      %v1040 = vld [vmem:[#allocation2 + $0x48] sm:$0xff]
      %v1041 = vld [vmem:[#allocation2 + $0x50] sm:$0xff]
      %v1042 = vld [vmem:[#allocation2 + $0x58] sm:$0xff]
      %v1043 = vld [vmem:[#allocation2 + $0x60] sm:$0xff]
      %v1044 = vld [vmem:[#allocation2 + $0x68] sm:$0xff]
      %v1045 = vld [vmem:[#allocation2 + $0x70] sm:$0xff]
      %v1046 = vld [vmem:[#allocation2 + $0x78] sm:$0xff]
      %v1047 = vld [vmem:[#allocation2 + $0x80] sm:$0xff]
      %v1048 = vld [vmem:[#allocation2 + $0x88] sm:$0xff]
      %v1049 = vld [vmem:[#allocation2 + $0x90] sm:$0xff]
      %v1050 = vld [vmem:[#allocation2 + $0x98] sm:$0xff]
      %v1051 = vld [vmem:[#allocation2 + $0xa0] sm:$0xff]
      %v1052 = vld [vmem:[#allocation2 + $0xa8] sm:$0xff]
      %v1053 = vld [vmem:[#allocation2 + $0xb0] sm:$0xff]
      %v1054 = vld [vmem:[#allocation2 + $0xb8] sm:$0xff]
      %v1055 = vld [vmem:[#allocation2 + $0xc0] sm:$0xff]
      %v1056 = vld [vmem:[#allocation2 + $0xc8] sm:$0xff]
      %v1057 = vld [vmem:[#allocation2 + $0xd0] sm:$0xff]
      %v1058 = vld [vmem:[#allocation2 + $0xd8] sm:$0xff]
      %v1059 = vld [vmem:[#allocation2 + $0xe0] sm:$0xff]
      %v1060 = vld [vmem:[#allocation2 + $0xe8] sm:$0xff]
      %v1061 = vld [vmem:[#allocation2 + $0xf0] sm:$0xff]
      %v1062 = vld [vmem:[#allocation2 + $0xf8] sm:$0xff]
      %1064 = vset.pattern.permute.xlu0 0
      %1065 = vperm.xlu0 %1064, %v968
      %v1066 = vpop.permute.xlu0 %1065
      %1069 = vset.pattern.permute.xlu0 0
      %1070 = vperm.xlu0 %1069, %v970
      %v1071 = vpop.permute.xlu0 %1070
      %1074 = vset.pattern.permute.xlu0 0
      %1075 = vperm.xlu0 %1074, %v972
      %v1076 = vpop.permute.xlu0 %1075
      %1079 = vset.pattern.permute.xlu0 0
      %1080 = vperm.xlu0 %1079, %v974
      %v1081 = vpop.permute.xlu0 %1080
      %1084 = vset.pattern.permute.xlu0 0
      %1085 = vperm.xlu0 %1084, %v976
      %v1086 = vpop.permute.xlu0 %1085
      %1089 = vset.pattern.permute.xlu0 0
      %1090 = vperm.xlu0 %1089, %v978
      %v1091 = vpop.permute.xlu0 %1090
      %1094 = vset.pattern.permute.xlu0 0
      %1095 = vperm.xlu0 %1094, %v980
      %v1096 = vpop.permute.xlu0 %1095
      %1099 = vset.pattern.permute.xlu0 0
      %1100 = vperm.xlu0 %1099, %v982
      %v1101 = vpop.permute.xlu0 %1100
      %1104 = vset.pattern.permute.xlu0 0
      %1105 = vperm.xlu0 %1104, %v984
      %v1106 = vpop.permute.xlu0 %1105
      %1109 = vset.pattern.permute.xlu0 0
      %1110 = vperm.xlu0 %1109, %v986
      %v1111 = vpop.permute.xlu0 %1110
      %1114 = vset.pattern.permute.xlu0 0
      %1115 = vperm.xlu0 %1114, %v988
      %v1116 = vpop.permute.xlu0 %1115
      %1119 = vset.pattern.permute.xlu0 0
      %1120 = vperm.xlu0 %1119, %v990
      %v1121 = vpop.permute.xlu0 %1120
      %1124 = vset.pattern.permute.xlu0 0
      %1125 = vperm.xlu0 %1124, %v992
      %v1126 = vpop.permute.xlu0 %1125
      %1129 = vset.pattern.permute.xlu0 0
      %1130 = vperm.xlu0 %1129, %v994
      %v1131 = vpop.permute.xlu0 %1130
      %1134 = vset.pattern.permute.xlu0 0
      %1135 = vperm.xlu0 %1134, %v996
      %v1136 = vpop.permute.xlu0 %1135
      %1139 = vset.pattern.permute.xlu0 0
      %1140 = vperm.xlu0 %1139, %v998
      %v1141 = vpop.permute.xlu0 %1140
      %1144 = vset.pattern.permute.xlu0 0
      %1145 = vperm.xlu0 %1144, %v1000
      %v1146 = vpop.permute.xlu0 %1145
      %1149 = vset.pattern.permute.xlu0 0
      %1150 = vperm.xlu0 %1149, %v1002
      %v1151 = vpop.permute.xlu0 %1150
      %1154 = vset.pattern.permute.xlu0 0
      %1155 = vperm.xlu0 %1154, %v1004
      %v1156 = vpop.permute.xlu0 %1155
      %1159 = vset.pattern.permute.xlu0 0
      %1160 = vperm.xlu0 %1159, %v1006
      %v1161 = vpop.permute.xlu0 %1160
      %1164 = vset.pattern.permute.xlu0 0
      %1165 = vperm.xlu0 %1164, %v1008
      %v1166 = vpop.permute.xlu0 %1165
      %1169 = vset.pattern.permute.xlu0 0
      %1170 = vperm.xlu0 %1169, %v1010
      %v1171 = vpop.permute.xlu0 %1170
      %1174 = vset.pattern.permute.xlu0 0
      %1175 = vperm.xlu0 %1174, %v1012
      %v1176 = vpop.permute.xlu0 %1175
      %1179 = vset.pattern.permute.xlu0 0
      %1180 = vperm.xlu0 %1179, %v1014
      %v1181 = vpop.permute.xlu0 %1180
      %1184 = vset.pattern.permute.xlu0 0
      %1185 = vperm.xlu0 %1184, %v1016
      %v1186 = vpop.permute.xlu0 %1185
      %1189 = vset.pattern.permute.xlu0 0
      %1190 = vperm.xlu0 %1189, %v1018
      %v1191 = vpop.permute.xlu0 %1190
      %1194 = vset.pattern.permute.xlu0 0
      %1195 = vperm.xlu0 %1194, %v1020
      %v1196 = vpop.permute.xlu0 %1195
      %1199 = vset.pattern.permute.xlu0 0
      %1200 = vperm.xlu0 %1199, %v1022
      %v1201 = vpop.permute.xlu0 %1200
      %1204 = vset.pattern.permute.xlu0 0
      %1205 = vperm.xlu0 %1204, %v1024
      %v1206 = vpop.permute.xlu0 %1205
      %1209 = vset.pattern.permute.xlu0 0
      %1210 = vperm.xlu0 %1209, %v1026
      %v1211 = vpop.permute.xlu0 %1210
      %1214 = vset.pattern.permute.xlu0 0
      %1215 = vperm.xlu0 %1214, %v1028
      %v1216 = vpop.permute.xlu0 %1215
      %1219 = vset.pattern.permute.xlu0 0
      %1220 = vperm.xlu0 %1219, %v1030
      %v1221 = vpop.permute.xlu0 %1220
      %v1223 = vmul.f32 %v1031, %v1066
      %v1224 = vmul.f32 %v1032, %v1071
      %v1225 = vmul.f32 %v1033, %v1076
      %v1226 = vmul.f32 %v1034, %v1081
      %v1227 = vmul.f32 %v1035, %v1086
      %v1228 = vmul.f32 %v1036, %v1091
      %v1229 = vmul.f32 %v1037, %v1096
      %v1230 = vmul.f32 %v1038, %v1101
      %v1231 = vmul.f32 %v1039, %v1106
      %v1232 = vmul.f32 %v1040, %v1111
      %v1233 = vmul.f32 %v1041, %v1116
      %v1234 = vmul.f32 %v1042, %v1121
      %v1235 = vmul.f32 %v1043, %v1126
      %v1236 = vmul.f32 %v1044, %v1131
      %v1237 = vmul.f32 %v1045, %v1136
      %v1238 = vmul.f32 %v1046, %v1141
      %v1239 = vmul.f32 %v1047, %v1146
      %v1240 = vmul.f32 %v1048, %v1151
      %v1241 = vmul.f32 %v1049, %v1156
      %v1242 = vmul.f32 %v1050, %v1161
      %v1243 = vmul.f32 %v1051, %v1166
      %v1244 = vmul.f32 %v1052, %v1171
      %v1245 = vmul.f32 %v1053, %v1176
      %v1246 = vmul.f32 %v1054, %v1181
      %v1247 = vmul.f32 %v1055, %v1186
      %v1248 = vmul.f32 %v1056, %v1191
      %v1249 = vmul.f32 %v1057, %v1196
      %v1250 = vmul.f32 %v1058, %v1201
      %v1251 = vmul.f32 %v1059, %v1206
      %v1252 = vmul.f32 %v1060, %v1211
      %v1253 = vmul.f32 %v1061, %v1216
      %v1254 = vmul.f32 %v1062, %v1221
      %v1255 = vpack.c.bf16 %v1224, %v1223
      %v1256 = vpack.c.bf16 %v1226, %v1225
      %v1257 = vpack.c.bf16 %v1228, %v1227
      %v1258 = vpack.c.bf16 %v1230, %v1229
      %v1259 = vpack.c.bf16 %v1232, %v1231
      %v1260 = vpack.c.bf16 %v1234, %v1233
      %v1261 = vpack.c.bf16 %v1236, %v1235
      %v1262 = vpack.c.bf16 %v1238, %v1237
      %v1263 = vpack.c.bf16 %v1240, %v1239
      %v1264 = vpack.c.bf16 %v1242, %v1241
      %v1265 = vpack.c.bf16 %v1244, %v1243
      %v1266 = vpack.c.bf16 %v1246, %v1245
      %v1267 = vpack.c.bf16 %v1248, %v1247
      %v1268 = vpack.c.bf16 %v1250, %v1249
      %v1269 = vpack.c.bf16 %v1252, %v1251
      %v1270 = vpack.c.bf16 %v1254, %v1253
      %v1271 = vld [vmem:[#allocation9] sm:$0xf]
      %v1272 = vld [vmem:[#allocation9 + $0x4] sm:$0xf]
      %v1273 = vld [vmem:[#allocation9 + $0x8] sm:$0xf]
      %v1274 = vld [vmem:[#allocation9 + $0xc] sm:$0xf]
      %v1275 = vld [vmem:[#allocation9 + $0x10] sm:$0xf]
      %v1276 = vld [vmem:[#allocation9 + $0x14] sm:$0xf]
      %v1277 = vld [vmem:[#allocation9 + $0x18] sm:$0xf]
      %v1278 = vld [vmem:[#allocation9 + $0x1c] sm:$0xf]
      %v1279 = vld [vmem:[#allocation9 + $0x20] sm:$0xf]
      %v1280 = vld [vmem:[#allocation9 + $0x24] sm:$0xf]
      %v1281 = vld [vmem:[#allocation9 + $0x28] sm:$0xf]
      %v1282 = vld [vmem:[#allocation9 + $0x2c] sm:$0xf]
      %v1283 = vld [vmem:[#allocation9 + $0x30] sm:$0xf]
      %v1284 = vld [vmem:[#allocation9 + $0x34] sm:$0xf]
      %v1285 = vld [vmem:[#allocation9 + $0x38] sm:$0xf]
      %v1286 = vld [vmem:[#allocation9 + $0x3c] sm:$0xf]
      %v1287 = vld [vmem:[#allocation9 + $0x40] sm:$0xf]
      %v1288 = vld [vmem:[#allocation9 + $0x44] sm:$0xf]
      %v1289 = vld [vmem:[#allocation9 + $0x48] sm:$0xf]
      %v1290 = vld [vmem:[#allocation9 + $0x4c] sm:$0xf]
      %v1291 = vld [vmem:[#allocation9 + $0x50] sm:$0xf]
      %v1292 = vld [vmem:[#allocation9 + $0x54] sm:$0xf]
      %v1293 = vld [vmem:[#allocation9 + $0x58] sm:$0xf]
      %v1294 = vld [vmem:[#allocation9 + $0x5c] sm:$0xf]
      %v1295 = vld [vmem:[#allocation9 + $0x60] sm:$0xf]
      %v1296 = vld [vmem:[#allocation9 + $0x64] sm:$0xf]
      %v1297 = vld [vmem:[#allocation9 + $0x68] sm:$0xf]
      %v1298 = vld [vmem:[#allocation9 + $0x6c] sm:$0xf]
      %v1299 = vld [vmem:[#allocation9 + $0x70] sm:$0xf]
      %v1300 = vld [vmem:[#allocation9 + $0x74] sm:$0xf]
      %v1301 = vld [vmem:[#allocation9 + $0x78] sm:$0xf]
      %v1302 = vld [vmem:[#allocation9 + $0x7c] sm:$0xf]
      %v1335 = vunpack.c.l.b16 %v1271
      %v1336 = vunpack.c.l.b16 %v1272
      %v1337 = vunpack.c.l.b16 %v1273
      %v1338 = vunpack.c.l.b16 %v1274
      %v1339 = vunpack.c.l.b16 %v1275
      %v1340 = vunpack.c.l.b16 %v1276
      %v1341 = vunpack.c.l.b16 %v1277
      %v1342 = vunpack.c.l.b16 %v1278
      %v1343 = vunpack.c.l.b16 %v1279
      %v1344 = vunpack.c.l.b16 %v1280
      %v1345 = vunpack.c.l.b16 %v1281
      %v1346 = vunpack.c.l.b16 %v1282
      %v1347 = vunpack.c.l.b16 %v1283
      %v1348 = vunpack.c.l.b16 %v1284
      %v1349 = vunpack.c.l.b16 %v1285
      %v1350 = vunpack.c.l.b16 %v1286
      %v1351 = vunpack.c.l.b16 %v1287
      %v1352 = vunpack.c.l.b16 %v1288
      %v1353 = vunpack.c.l.b16 %v1289
      %v1354 = vunpack.c.l.b16 %v1290
      %v1355 = vunpack.c.l.b16 %v1291
      %v1356 = vunpack.c.l.b16 %v1292
      %v1357 = vunpack.c.l.b16 %v1293
      %v1358 = vunpack.c.l.b16 %v1294
      %v1359 = vunpack.c.l.b16 %v1295
      %v1360 = vunpack.c.l.b16 %v1296
      %v1361 = vunpack.c.l.b16 %v1297
      %v1362 = vunpack.c.l.b16 %v1298
      %v1363 = vunpack.c.l.b16 %v1299
      %v1364 = vunpack.c.l.b16 %v1300
      %v1365 = vunpack.c.l.b16 %v1301
      %v1366 = vunpack.c.l.b16 %v1302
      %v1367 = vpack.c.b16 %v1336, %v1335
      %v1368 = vpack.c.b16 %v1338, %v1337
      %v1369 = vpack.c.b16 %v1340, %v1339
      %v1370 = vpack.c.b16 %v1342, %v1341
      %v1371 = vpack.c.b16 %v1344, %v1343
      %v1372 = vpack.c.b16 %v1346, %v1345
      %v1373 = vpack.c.b16 %v1348, %v1347
      %v1374 = vpack.c.b16 %v1350, %v1349
      %v1375 = vpack.c.b16 %v1352, %v1351
      %v1376 = vpack.c.b16 %v1354, %v1353
      %v1377 = vpack.c.b16 %v1356, %v1355
      %v1378 = vpack.c.b16 %v1358, %v1357
      %v1379 = vpack.c.b16 %v1360, %v1359
      %v1380 = vpack.c.b16 %v1362, %v1361
      %v1381 = vpack.c.b16 %v1364, %v1363
      %v1382 = vpack.c.b16 %v1366, %v1365
      %v1399 = vld [vmem:[#allocation10] sm:$0xf]
      %v1400 = vld [vmem:[#allocation10 + $0x4] sm:$0xf]
      %v1401 = vld [vmem:[#allocation10 + $0x8] sm:$0xf]
      %v1402 = vld [vmem:[#allocation10 + $0xc] sm:$0xf]
      %v1403 = vld [vmem:[#allocation10 + $0x10] sm:$0xf]
      %v1404 = vld [vmem:[#allocation10 + $0x14] sm:$0xf]
      %v1405 = vld [vmem:[#allocation10 + $0x18] sm:$0xf]
      %v1406 = vld [vmem:[#allocation10 + $0x1c] sm:$0xf]
      %v1407 = vld [vmem:[#allocation10 + $0x20] sm:$0xf]
      %v1408 = vld [vmem:[#allocation10 + $0x24] sm:$0xf]
      %v1409 = vld [vmem:[#allocation10 + $0x28] sm:$0xf]
      %v1410 = vld [vmem:[#allocation10 + $0x2c] sm:$0xf]
      %v1411 = vld [vmem:[#allocation10 + $0x30] sm:$0xf]
      %v1412 = vld [vmem:[#allocation10 + $0x34] sm:$0xf]
      %v1413 = vld [vmem:[#allocation10 + $0x38] sm:$0xf]
      %v1414 = vld [vmem:[#allocation10 + $0x3c] sm:$0xf]
      %v1415 = vld [vmem:[#allocation10 + $0x40] sm:$0xf]
      %v1416 = vld [vmem:[#allocation10 + $0x44] sm:$0xf]
      %v1417 = vld [vmem:[#allocation10 + $0x48] sm:$0xf]
      %v1418 = vld [vmem:[#allocation10 + $0x4c] sm:$0xf]
      %v1419 = vld [vmem:[#allocation10 + $0x50] sm:$0xf]
      %v1420 = vld [vmem:[#allocation10 + $0x54] sm:$0xf]
      %v1421 = vld [vmem:[#allocation10 + $0x58] sm:$0xf]
      %v1422 = vld [vmem:[#allocation10 + $0x5c] sm:$0xf]
      %v1423 = vld [vmem:[#allocation10 + $0x60] sm:$0xf]
      %v1424 = vld [vmem:[#allocation10 + $0x64] sm:$0xf]
      %v1425 = vld [vmem:[#allocation10 + $0x68] sm:$0xf]
      %v1426 = vld [vmem:[#allocation10 + $0x6c] sm:$0xf]
      %v1427 = vld [vmem:[#allocation10 + $0x70] sm:$0xf]
      %v1428 = vld [vmem:[#allocation10 + $0x74] sm:$0xf]
      %v1429 = vld [vmem:[#allocation10 + $0x78] sm:$0xf]
      %v1430 = vld [vmem:[#allocation10 + $0x7c] sm:$0xf]
      %v1431 = vld [vmem:[%s4] sm:$0x1]
      %v1433 = vlaneseq
      %v1434 = vshrl.u32 %v1433, 7
      %v1435 = vsub.s32 0, %v1434
      %v1436 = vrot.slane %v1431, %v1435
      %v1470 = vunpack.c.l.b16 %v1399
      %v1471 = vunpack.c.l.b16 %v1400
      %v1472 = vunpack.c.l.b16 %v1401
      %v1473 = vunpack.c.l.b16 %v1402
      %v1474 = vunpack.c.l.b16 %v1403
      %v1475 = vunpack.c.l.b16 %v1404
      %v1476 = vunpack.c.l.b16 %v1405
      %v1477 = vunpack.c.l.b16 %v1406
      %v1478 = vunpack.c.l.b16 %v1407
      %v1479 = vunpack.c.l.b16 %v1408
      %v1480 = vunpack.c.l.b16 %v1409
      %v1481 = vunpack.c.l.b16 %v1410
      %v1482 = vunpack.c.l.b16 %v1411
      %v1483 = vunpack.c.l.b16 %v1412
      %v1484 = vunpack.c.l.b16 %v1413
      %v1485 = vunpack.c.l.b16 %v1414
      %v1486 = vunpack.c.l.b16 %v1415
      %v1487 = vunpack.c.l.b16 %v1416
      %v1488 = vunpack.c.l.b16 %v1417
      %v1489 = vunpack.c.l.b16 %v1418
      %v1490 = vunpack.c.l.b16 %v1419
      %v1491 = vunpack.c.l.b16 %v1420
      %v1492 = vunpack.c.l.b16 %v1421
      %v1493 = vunpack.c.l.b16 %v1422
      %v1494 = vunpack.c.l.b16 %v1423
      %v1495 = vunpack.c.l.b16 %v1424
      %v1496 = vunpack.c.l.b16 %v1425
      %v1497 = vunpack.c.l.b16 %v1426
      %v1498 = vunpack.c.l.b16 %v1427
      %v1499 = vunpack.c.l.b16 %v1428
      %v1500 = vunpack.c.l.b16 %v1429
      %v1501 = vunpack.c.l.b16 %v1430
      %v1502 = vpack.c.b16 %v1471, %v1470
      %v1503 = vpack.c.b16 %v1473, %v1472
      %v1504 = vpack.c.b16 %v1475, %v1474
      %v1505 = vpack.c.b16 %v1477, %v1476
      %v1506 = vpack.c.b16 %v1479, %v1478
      %v1507 = vpack.c.b16 %v1481, %v1480
      %v1508 = vpack.c.b16 %v1483, %v1482
      %v1509 = vpack.c.b16 %v1485, %v1484
      %v1510 = vpack.c.b16 %v1487, %v1486
      %v1511 = vpack.c.b16 %v1489, %v1488
      %v1512 = vpack.c.b16 %v1491, %v1490
      %v1513 = vpack.c.b16 %v1493, %v1492
      %v1514 = vpack.c.b16 %v1495, %v1494
      %v1515 = vpack.c.b16 %v1497, %v1496
      %v1516 = vpack.c.b16 %v1499, %v1498
      %v1517 = vpack.c.b16 %v1501, %v1500
      %1534 = vmatprep.subr.bf16.mxu0 0
      %1535 = vmatpush1.bf16.msra.mxu0 %v1509
      %1536 = vmatprep.subr.bf16.mxu0 0
      %1537 = vmatpush1.bf16.msra.mxu0 %v1508
      %1538 = vmatprep.subr.bf16.mxu0 0
      %1539 = vmatpush1.bf16.msra.mxu0 %v1507
      %1540 = vmatprep.subr.bf16.mxu0 0
      %1541 = vmatpush1.bf16.msra.mxu0 %v1506
      %1542 = vmatprep.subr.bf16.mxu0 0
      %1543 = vmatpush1.bf16.msra.mxu0 %v1505
      %1544 = vmatprep.subr.bf16.mxu0 0
      %1545 = vmatpush1.bf16.msra.mxu0 %v1504
      %1546 = vmatprep.subr.bf16.mxu0 0
      %1547 = vmatpush1.bf16.msra.mxu0 %v1503
      %1548 = vmatprep.subr.bf16.mxu0 0
      %1549 = vmatpush1.bf16.msra.mxu0 %v1502
      %1550 = vmatprep.subr.bf16.mxu0 0
      %1551 = vmatpush2.bf16.msra.mxu0 %v1517
      %1552 = vmatprep.subr.bf16.mxu0 0
      %1553 = vmatpush2.bf16.msra.mxu0 %v1516
      %1554 = vmatprep.subr.bf16.mxu0 0
      %1555 = vmatpush2.bf16.msra.mxu0 %v1515
      %1556 = vmatprep.subr.bf16.mxu0 0
      %1557 = vmatpush2.bf16.msra.mxu0 %v1514
      %1558 = vmatprep.subr.bf16.mxu0 0
      %1559 = vmatpush2.bf16.msra.mxu0 %v1513
      %1560 = vmatprep.subr.bf16.mxu0 0
      %1561 = vmatpush2.bf16.msra.mxu0 %v1512
      %1562 = vmatprep.subr.bf16.mxu0 0
      %1563 = vmatpush2.bf16.msra.mxu0 %v1511
      %1564 = vmatprep.subr.bf16.mxu0 0
      %1565 = vmatpush2.bf16.msra.mxu0 %v1510
      %1566 = vmatprep.mubr.bf16.mxu0 %v1367
      %1567 = vmatmul.mubr.bf16.gmra.mxu0 %v1255
      %v1568 = vpop.f32.mrf.mxu0
      %v1569 = vadd.f32 %v1436, %v1568
      %v1570 = vpop.f32.mrf.mxu0
      %v1571 = vpop.f32.mrf.mxu0
      %v1572 = vadd.f32 %v1436, %v1571
      %v1573 = vpop.f32.mrf.mxu0
      %1574 = vmatprep.mubr.bf16.mxu0 %v1368
      %1575 = vmatmul.mubr.bf16.gmra.mxu0 %v1256
      %v1576 = vpop.f32.mrf.mxu0
      %v1577 = vadd.f32 %v1436, %v1576
      %v1578 = vpop.f32.mrf.mxu0
      %v1579 = vpop.f32.mrf.mxu0
      %v1580 = vadd.f32 %v1436, %v1579
      %v1581 = vpop.f32.mrf.mxu0
      %1582 = vmatprep.mubr.bf16.mxu0 %v1369
      %1583 = vmatmul.mubr.bf16.gmra.mxu0 %v1257
      %v1584 = vpop.f32.mrf.mxu0
      %v1585 = vadd.f32 %v1436, %v1584
      %v1586 = vpop.f32.mrf.mxu0
      %v1587 = vpop.f32.mrf.mxu0
      %v1588 = vadd.f32 %v1436, %v1587
      %v1589 = vpop.f32.mrf.mxu0
      %1590 = vmatprep.mubr.bf16.mxu0 %v1370
      %1591 = vmatmul.mubr.bf16.gmra.mxu0 %v1258
      %v1592 = vpop.f32.mrf.mxu0
      %v1593 = vadd.f32 %v1436, %v1592
      %v1594 = vpop.f32.mrf.mxu0
      %v1595 = vpop.f32.mrf.mxu0
      %v1596 = vadd.f32 %v1436, %v1595
      %v1597 = vpop.f32.mrf.mxu0
      %1598 = vmatprep.mubr.bf16.mxu0 %v1371
      %1599 = vmatmul.mubr.bf16.gmra.mxu0 %v1259
      %v1600 = vpop.f32.mrf.mxu0
      %v1601 = vadd.f32 %v1436, %v1600
      %v1602 = vpop.f32.mrf.mxu0
      %v1603 = vpop.f32.mrf.mxu0
      %v1604 = vadd.f32 %v1436, %v1603
      %v1605 = vpop.f32.mrf.mxu0
      %1606 = vmatprep.mubr.bf16.mxu0 %v1372
      %1607 = vmatmul.mubr.bf16.gmra.mxu0 %v1260
      %v1608 = vpop.f32.mrf.mxu0
      %v1609 = vadd.f32 %v1436, %v1608
      %v1610 = vpop.f32.mrf.mxu0
      %v1611 = vpop.f32.mrf.mxu0
      %v1612 = vadd.f32 %v1436, %v1611
      %v1613 = vpop.f32.mrf.mxu0
      %1614 = vmatprep.mubr.bf16.mxu0 %v1373
      %1615 = vmatmul.mubr.bf16.gmra.mxu0 %v1261
      %v1616 = vpop.f32.mrf.mxu0
      %v1617 = vadd.f32 %v1436, %v1616
      %v1618 = vpop.f32.mrf.mxu0
      %v1619 = vpop.f32.mrf.mxu0
      %v1620 = vadd.f32 %v1436, %v1619
      %v1621 = vpop.f32.mrf.mxu0
      %1622 = vmatprep.mubr.bf16.mxu0 %v1374
      %1623 = vmatmul.mubr.bf16.gmra.mxu0 %v1262
      %v1624 = vpop.f32.mrf.mxu0
      %v1625 = vadd.f32 %v1436, %v1624
      %v1626 = vpop.f32.mrf.mxu0
      %v1627 = vpop.f32.mrf.mxu0
      %v1628 = vadd.f32 %v1436, %v1627
      %v1629 = vpop.f32.mrf.mxu0
      %1630 = vmatprep.mubr.bf16.mxu0 %v1375
      %1631 = vmatmul.mubr.bf16.gmra.mxu0 %v1263
      %v1632 = vpop.f32.mrf.mxu0
      %v1633 = vadd.f32 %v1436, %v1632
      %v1634 = vpop.f32.mrf.mxu0
      %v1635 = vpop.f32.mrf.mxu0
      %v1636 = vadd.f32 %v1436, %v1635
      %v1637 = vpop.f32.mrf.mxu0
      %1638 = vmatprep.mubr.bf16.mxu0 %v1376
      %1639 = vmatmul.mubr.bf16.gmra.mxu0 %v1264
      %v1640 = vpop.f32.mrf.mxu0
      %v1641 = vadd.f32 %v1436, %v1640
      %v1642 = vpop.f32.mrf.mxu0
      %v1643 = vpop.f32.mrf.mxu0
      %v1644 = vadd.f32 %v1436, %v1643
      %v1645 = vpop.f32.mrf.mxu0
      %1646 = vmatprep.mubr.bf16.mxu0 %v1377
      %1647 = vmatmul.mubr.bf16.gmra.mxu0 %v1265
      %v1648 = vpop.f32.mrf.mxu0
      %v1649 = vadd.f32 %v1436, %v1648
      %v1650 = vpop.f32.mrf.mxu0
      %v1651 = vpop.f32.mrf.mxu0
      %v1652 = vadd.f32 %v1436, %v1651
      %v1653 = vpop.f32.mrf.mxu0
      %1654 = vmatprep.mubr.bf16.mxu0 %v1378
      %1655 = vmatmul.mubr.bf16.gmra.mxu0 %v1266
      %v1656 = vpop.f32.mrf.mxu0
      %v1657 = vadd.f32 %v1436, %v1656
      %v1658 = vpop.f32.mrf.mxu0
      %v1659 = vpop.f32.mrf.mxu0
      %v1660 = vadd.f32 %v1436, %v1659
      %v1661 = vpop.f32.mrf.mxu0
      %1662 = vmatprep.mubr.bf16.mxu0 %v1379
      %1663 = vmatmul.mubr.bf16.gmra.mxu0 %v1267
      %v1664 = vpop.f32.mrf.mxu0
      %v1665 = vadd.f32 %v1436, %v1664
      %v1666 = vpop.f32.mrf.mxu0
      %v1667 = vpop.f32.mrf.mxu0
      %v1668 = vadd.f32 %v1436, %v1667
      %v1669 = vpop.f32.mrf.mxu0
      %1670 = vmatprep.mubr.bf16.mxu0 %v1380
      %1671 = vmatmul.mubr.bf16.gmra.mxu0 %v1268
      %v1672 = vpop.f32.mrf.mxu0
      %v1673 = vadd.f32 %v1436, %v1672
      %v1674 = vpop.f32.mrf.mxu0
      %v1675 = vpop.f32.mrf.mxu0
      %v1676 = vadd.f32 %v1436, %v1675
      %v1677 = vpop.f32.mrf.mxu0
      %1678 = vmatprep.mubr.bf16.mxu0 %v1381
      %1679 = vmatmul.mubr.bf16.gmra.mxu0 %v1269
      %v1680 = vpop.f32.mrf.mxu0
      %v1681 = vadd.f32 %v1436, %v1680
      %v1682 = vpop.f32.mrf.mxu0
      %v1683 = vpop.f32.mrf.mxu0
      %v1684 = vadd.f32 %v1436, %v1683
      %v1685 = vpop.f32.mrf.mxu0
      %1686 = vmatprep.mubr.bf16.mxu0 %v1382
      %1687 = vmatmul.mubr.bf16.gmra.mxu0 %v1270
      %v1688 = vpop.f32.mrf.mxu0
      %v1689 = vadd.f32 %v1436, %v1688
      %v1690 = vpop.f32.mrf.mxu0
      %v1691 = vpop.f32.mrf.mxu0
      %v1692 = vadd.f32 %v1436, %v1691
      %v1693 = vpop.f32.mrf.mxu0
      %1694 = vdwg.mxu0
      %v1695 = vmax.f32 %v1569, 0.0
      %v1696 = vmax.f32 %v1572, 0.0
      %v1697 = vmax.f32 %v1577, 0.0
      %v1698 = vmax.f32 %v1580, 0.0
      %v1699 = vmax.f32 %v1585, 0.0
      %v1700 = vmax.f32 %v1588, 0.0
      %v1701 = vmax.f32 %v1593, 0.0
      %v1702 = vmax.f32 %v1596, 0.0
      %v1703 = vmax.f32 %v1601, 0.0
      %v1704 = vmax.f32 %v1604, 0.0
      %v1705 = vmax.f32 %v1609, 0.0
      %v1706 = vmax.f32 %v1612, 0.0
      %v1707 = vmax.f32 %v1617, 0.0
      %v1708 = vmax.f32 %v1620, 0.0
      %v1709 = vmax.f32 %v1625, 0.0
      %v1710 = vmax.f32 %v1628, 0.0
      %v1711 = vmax.f32 %v1633, 0.0
      %v1712 = vmax.f32 %v1636, 0.0
      %v1713 = vmax.f32 %v1641, 0.0
      %v1714 = vmax.f32 %v1644, 0.0
      %v1715 = vmax.f32 %v1649, 0.0
      %v1716 = vmax.f32 %v1652, 0.0
      %v1717 = vmax.f32 %v1657, 0.0
      %v1718 = vmax.f32 %v1660, 0.0
      %v1719 = vmax.f32 %v1665, 0.0
      %v1720 = vmax.f32 %v1668, 0.0
      %v1721 = vmax.f32 %v1673, 0.0
      %v1722 = vmax.f32 %v1676, 0.0
      %v1723 = vmax.f32 %v1681, 0.0
      %v1724 = vmax.f32 %v1684, 0.0
      %v1725 = vmax.f32 %v1689, 0.0
      %v1726 = vmax.f32 %v1692, 0.0
      %v1727 = vpack.c.bf16 %v1696, %v1695
      %v1728 = vpack.c.bf16 %v1698, %v1697
      %v1729 = vpack.c.bf16 %v1700, %v1699
      %v1730 = vpack.c.bf16 %v1702, %v1701
      %v1731 = vpack.c.bf16 %v1704, %v1703
      %v1732 = vpack.c.bf16 %v1706, %v1705
      %v1733 = vpack.c.bf16 %v1708, %v1707
      %v1734 = vpack.c.bf16 %v1710, %v1709
      %v1735 = vpack.c.bf16 %v1712, %v1711
      %v1736 = vpack.c.bf16 %v1714, %v1713
      %v1737 = vpack.c.bf16 %v1716, %v1715
      %v1738 = vpack.c.bf16 %v1718, %v1717
      %v1739 = vpack.c.bf16 %v1720, %v1719
      %v1740 = vpack.c.bf16 %v1722, %v1721
      %v1741 = vpack.c.bf16 %v1724, %v1723
      %v1742 = vpack.c.bf16 %v1726, %v1725
      %v1759 = vunpack.c.l.b16 %v1727
      %v1760 = vunpack.c.h.b16 %v1727
      %v1761 = vunpack.c.l.b16 %v1728
      %v1762 = vunpack.c.h.b16 %v1728
      %v1763 = vunpack.c.l.b16 %v1729
      %v1764 = vunpack.c.h.b16 %v1729
      %v1765 = vunpack.c.l.b16 %v1730
      %v1766 = vunpack.c.h.b16 %v1730
      %v1767 = vunpack.c.l.b16 %v1731
      %v1768 = vunpack.c.h.b16 %v1731
      %v1769 = vunpack.c.l.b16 %v1732
      %v1770 = vunpack.c.h.b16 %v1732
      %v1771 = vunpack.c.l.b16 %v1733
      %v1772 = vunpack.c.h.b16 %v1733
      %v1773 = vunpack.c.l.b16 %v1734
      %v1774 = vunpack.c.h.b16 %v1734
      %v1775 = vunpack.c.l.b16 %v1735
      %v1776 = vunpack.c.h.b16 %v1735
      %v1777 = vunpack.c.l.b16 %v1736
      %v1778 = vunpack.c.h.b16 %v1736
      %v1779 = vunpack.c.l.b16 %v1737
      %v1780 = vunpack.c.h.b16 %v1737
      %v1781 = vunpack.c.l.b16 %v1738
      %v1782 = vunpack.c.h.b16 %v1738
      %v1783 = vunpack.c.l.b16 %v1739
      %v1784 = vunpack.c.h.b16 %v1739
      %v1785 = vunpack.c.l.b16 %v1740
      %v1786 = vunpack.c.h.b16 %v1740
      %v1787 = vunpack.c.l.b16 %v1741
      %v1788 = vunpack.c.h.b16 %v1741
      %v1789 = vunpack.c.l.b16 %v1742
      %v1790 = vunpack.c.h.b16 %v1742
      %v1791 = vpack.c.b16 %v1759, %v1759
      %v1792 = vpack.c.b16 %v1760, %v1760
      %v1793 = vpack.c.b16 %v1761, %v1761
      %v1794 = vpack.c.b16 %v1762, %v1762
      %v1795 = vpack.c.b16 %v1763, %v1763
      %v1796 = vpack.c.b16 %v1764, %v1764
      %v1797 = vpack.c.b16 %v1765, %v1765
      %v1798 = vpack.c.b16 %v1766, %v1766
      %v1799 = vpack.c.b16 %v1767, %v1767
      %v1800 = vpack.c.b16 %v1768, %v1768
      %v1801 = vpack.c.b16 %v1769, %v1769
      %v1802 = vpack.c.b16 %v1770, %v1770
      %v1803 = vpack.c.b16 %v1771, %v1771
      %v1804 = vpack.c.b16 %v1772, %v1772
      %v1805 = vpack.c.b16 %v1773, %v1773
      %v1806 = vpack.c.b16 %v1774, %v1774
      %v1807 = vpack.c.b16 %v1775, %v1775
      %v1808 = vpack.c.b16 %v1776, %v1776
      %v1809 = vpack.c.b16 %v1777, %v1777
      %v1810 = vpack.c.b16 %v1778, %v1778
      %v1811 = vpack.c.b16 %v1779, %v1779
      %v1812 = vpack.c.b16 %v1780, %v1780
      %v1813 = vpack.c.b16 %v1781, %v1781
      %v1814 = vpack.c.b16 %v1782, %v1782
      %v1815 = vpack.c.b16 %v1783, %v1783
      %v1816 = vpack.c.b16 %v1784, %v1784
      %v1817 = vpack.c.b16 %v1785, %v1785
      %v1818 = vpack.c.b16 %v1786, %v1786
      %v1819 = vpack.c.b16 %v1787, %v1787
      %v1820 = vpack.c.b16 %v1788, %v1788
      %v1821 = vpack.c.b16 %v1789, %v1789
      %v1822 = vpack.c.b16 %v1790, %v1790
      %1855 = vst [vmem:[#allocation12] sm:$0xf] %v1791
      %1856 = vst [vmem:[#allocation12 + $0x4] sm:$0xf] %v1792
      %1857 = vst [vmem:[#allocation12 + $0x8] sm:$0xf] %v1793
      %1858 = vst [vmem:[#allocation12 + $0xc] sm:$0xf] %v1794
      %1859 = vst [vmem:[#allocation12 + $0x10] sm:$0xf] %v1795
      %1860 = vst [vmem:[#allocation12 + $0x14] sm:$0xf] %v1796
      %1861 = vst [vmem:[#allocation12 + $0x18] sm:$0xf] %v1797
      %1862 = vst [vmem:[#allocation12 + $0x1c] sm:$0xf] %v1798
      %1863 = vst [vmem:[#allocation12 + $0x20] sm:$0xf] %v1799
      %1864 = vst [vmem:[#allocation12 + $0x24] sm:$0xf] %v1800
      %1865 = vst [vmem:[#allocation12 + $0x28] sm:$0xf] %v1801
      %1866 = vst [vmem:[#allocation12 + $0x2c] sm:$0xf] %v1802
      %1867 = vst [vmem:[#allocation12 + $0x30] sm:$0xf] %v1803
      %1868 = vst [vmem:[#allocation12 + $0x34] sm:$0xf] %v1804
      %1869 = vst [vmem:[#allocation12 + $0x38] sm:$0xf] %v1805
      %1870 = vst [vmem:[#allocation12 + $0x3c] sm:$0xf] %v1806
      %1871 = vst [vmem:[#allocation12 + $0x40] sm:$0xf] %v1807
      %1872 = vst [vmem:[#allocation12 + $0x44] sm:$0xf] %v1808
      %1873 = vst [vmem:[#allocation12 + $0x48] sm:$0xf] %v1809
      %1874 = vst [vmem:[#allocation12 + $0x4c] sm:$0xf] %v1810
      %1875 = vst [vmem:[#allocation12 + $0x50] sm:$0xf] %v1811
      %1876 = vst [vmem:[#allocation12 + $0x54] sm:$0xf] %v1812
      %1877 = vst [vmem:[#allocation12 + $0x58] sm:$0xf] %v1813
      %1878 = vst [vmem:[#allocation12 + $0x5c] sm:$0xf] %v1814
      %1879 = vst [vmem:[#allocation12 + $0x60] sm:$0xf] %v1815
      %1880 = vst [vmem:[#allocation12 + $0x64] sm:$0xf] %v1816
      %1881 = vst [vmem:[#allocation12 + $0x68] sm:$0xf] %v1817
      %1882 = vst [vmem:[#allocation12 + $0x6c] sm:$0xf] %v1818
      %1883 = vst [vmem:[#allocation12 + $0x70] sm:$0xf] %v1819
      %1884 = vst [vmem:[#allocation12 + $0x74] sm:$0xf] %v1820
      %1885 = vst [vmem:[#allocation12 + $0x78] sm:$0xf] %v1821
      %1886 = vst [vmem:[#allocation12 + $0x7c] sm:$0xf] %v1822
    $region45: #{tpu_custom_call.1} parent=1 // pred_fallthru
      _
    // Predicated region
    $region46: #{tpu_custom_call.1} parent=1 // pred_check
      _
    $region47: #{tpu_custom_call.1} parent=1 // pred_check_branch
      %1888 = sbr.rel (0) target = $region49
    $region48: #{tpu_custom_call.1} parent=1 // pred_region
      %s1890 = ssub.s32 2048, 2048
      %1891 = vsyncadd [#allocation6], %s1890
      %s1892 = sshll.u32 [#allocation12], 4
      %s1893 = int_to_ptr.vmem [resolvable:$true] %s1892
      %1898 = dma.vmem_to_hbm [thread:$0]  %s1893, 2048, %s5, [#allocation6], 64, 64, 4
    $region49: #{tpu_custom_call.1} parent=1 // pred_fallthru
      _
    // Predicated region
    $region50: #{tpu_custom_call.1} parent=1 // pred_check
      _
    $region51: #{tpu_custom_call.1} parent=1 // pred_check_branch
      %1900 = sbr.rel (0) target = $region53
    $region52: #{tpu_custom_call.1} parent=1 // pred_region
      %1901 = dma.done [#allocation6], 2048
    $region53: #{tpu_custom_call.1} parent=1 // pred_fallthru
      _
    %1902 = vsyncpa [#allocation5], 1
    %1903 = vsyncpa [#allocation8], 1
    %1904 = vsyncpa [#allocation11], 1
    %1905 = vsyncpa [#allocation6], 1

</llo_original>
